<compile_context>
chip_gen: v7x
topology: tpu7x:2x2x1
jax: 0.10.0
libtpu: 0.0.40
codegen_flags: <defaults>
</compile_context>

<pallas_src>
import functools
import math

import jax
import jax.numpy as jnp
from jax import lax
from jax.experimental import pallas as pl
from jax.experimental.pallas import tpu as pltpu


# ----------------------------------------------------------------------------
# Fused per-layer kernel
# ----------------------------------------------------------------------------
def transformer_layer_kernel(
    x_ref, mbias_ref,
    ln1_g_ref, ln1_b_ref,
    wq_ref, bq_ref, wkv_ref, bkv_ref, wo_ref, bo_ref,
    ln2_g_ref, ln2_b_ref,
    w1_ref, b1_ref, w2_ref, b2_ref,
    o_ref,
    q_s, k_s, v_s,
    *, num_heads, head_dim, q_tile, causal,
):
    qi = pl.program_id(1)
    H, hd, tq = num_heads, head_dim, q_tile
    S = x_ref.shape[1]
    D = H * hd
    cd = wq_ref.dtype                        # matmul compute dtype (bf16 by default)
    scale = 1.0 / math.sqrt(hd)

    def layer_norm(v, g, b):                 # f32 elementwise math (row-wise)
        mu = jnp.mean(v, axis=-1, keepdims=True)
        var = jnp.mean((v - mu) ** 2, axis=-1, keepdims=True)
        return (v - mu) * lax.rsqrt(var + 1e-5) * g + b

    def gelu(v):                             # exact (erf) GELU, torch.nn.GELU default
        return 0.5 * v * (1.0 + lax.erf(v * (1.0 / math.sqrt(2.0))))

    # ---- once per (batch element, layer): LN1 + fused K/V over the full sequence ----
    @pl.when(qi == 0)
    def _():
        xf = x_ref[0].astype(jnp.float32)                                   # (S, D)
        xn = layer_norm(xf, ln1_g_ref[...], ln1_b_ref[...])
        kv = jnp.dot(xn.astype(cd), wkv_ref[...],
                     preferred_element_type=jnp.float32) + bkv_ref[...]     # (S, 2D)
        # One-time head split into (H, S, hd) scratch (amortized over all query tiles).
        for h in range(H):
            k_s[h] = kv[:, h * hd:(h + 1) * hd].astype(cd)
            v_s[h] = kv[:, D + h * hd:D + (h + 1) * hd].astype(cd)

    # ---- per query tile: Q proj + attention + out-proj + residual + LN2 + FFN + residual ----
    row0 = pl.multiple_of(qi * tq, tq)
    x = x_ref[0, pl.ds(row0, tq), :].astype(jnp.float32)                    # (tq, D)

    # LayerNorm is row-wise, so recomputing it on the tile rows is exact; Q is projected
    # for just this tile (same total FLOPs, no full-sequence Q scratch).
    xn_q = layer_norm(x, ln1_g_ref[...], ln1_b_ref[...])
    q = (jnp.dot(xn_q.astype(cd), wq_ref[...],
                 preferred_element_type=jnp.float32) + bq_ref[...]) * scale  # (tq, D)
    for h in range(H):
        q_s[h] = q[:, h * hd:(h + 1) * hd].astype(cd)                       # (H, tq, hd)

    s = jnp.einsum('hqd,hkd->hqk', q_s[...], k_s[...],
                   preferred_element_type=jnp.float32)                      # (H, tq, S)
    s = s + mbias_ref[0][None]                                              # key-padding bias
    if causal:
        rows = row0 + lax.broadcasted_iota(jnp.int32, (tq, S), 0)
        cols = lax.broadcasted_iota(jnp.int32, (tq, S), 1)
        s = s + jnp.where(cols <= rows, 0.0, -1e9)[None]

    m = jnp.max(s, axis=-1, keepdims=True)
    p = jnp.exp(s - m)
    l = jnp.sum(p, axis=-1, keepdims=True)
    ctx = jnp.einsum('hqk,hkd->hqd', p.astype(cd), v_s[...],
                     preferred_element_type=jnp.float32)                    # (H, tq, hd)
    # normalize AFTER the PV matmul: (tq, hd) work instead of (tq, S); EUP reciprocal.
    ctx = (ctx * pl.reciprocal(l, approx=True)).astype(cd)

    # Output projection: sum over heads of (tq, hd) @ (hd, D), accumulated in f32 vregs
    # (no concatenate, no lane-sparse activation slicing).
    attn = jnp.dot(ctx[0], wo_ref[0], preferred_element_type=jnp.float32)
    for h in range(1, H):
        attn = attn + jnp.dot(ctx[h], wo_ref[h], preferred_element_type=jnp.float32)
    x = x + attn + bo_ref[...]

    xn2 = layer_norm(x, ln2_g_ref[...], ln2_b_ref[...])
    h1 = jnp.dot(xn2.astype(cd), w1_ref[...],
                 preferred_element_type=jnp.float32) + b1_ref[...]
    h1 = gelu(h1)
    ff = jnp.dot(h1.astype(cd), w2_ref[...],
                 preferred_element_type=jnp.float32) + b2_ref[...]
    o_ref[0] = (x + ff).astype(o_ref.dtype)


# ----------------------------------------------------------------------------
# Wrapper: weight packing + one pallas_call per attention layer
# ----------------------------------------------------------------------------
def _pack_layer_params(raw, num_heads, head_dim, compute_dtype):
    (ln1_g, ln1_b, wq, bq, wk, bk, wv, bv, wo, bo,
     ln2_g, ln2_b, w1, b1, w2, b2) = raw
    D = num_heads * head_dim
    wkv = jnp.concatenate([wk, wv], axis=1).astype(compute_dtype)           # (D, 2D)
    bkv = jnp.concatenate([bk, bv], axis=1).astype(jnp.float32)             # (1, 2D)
    wo_h = wo.reshape(num_heads, head_dim, D).astype(compute_dtype)         # (H, hd, D)
    f32 = jnp.float32
    return (ln1_g.astype(f32), ln1_b.astype(f32),
            wq.astype(compute_dtype), bq.astype(f32),
            wkv, bkv, wo_h, bo.astype(f32),
            ln2_g.astype(f32), ln2_b.astype(f32),
            w1.astype(compute_dtype), b1.astype(f32),
            w2.astype(compute_dtype), b2.astype(f32))


def _choose_q_tile(S):
    # largest multiple-of-8 tile (<=256) that evenly divides S; otherwise full sequence.
    for cand in (256, 128, 64, 32, 16, 8):
        if cand < S and S % cand == 0:
            return cand
    return S


def transformer_forward(x, mask, params, *, num_heads, head_dim,
                        causal_mask=False, compute_dtype=jnp.bfloat16):
    B, S, D = x.shape
    assert D == num_heads * head_dim
    assert mask.shape == (B, S)

    tq = _choose_q_tile(S)
    nq = S // tq
    # key-padding bias hoisted out of the kernel (wrapper-side, one-time).
    mbias = ((1.0 - mask.astype(jnp.float32)) * (-1e9)).reshape(B, 1, S)

    kernel = functools.partial(
        transformer_layer_kernel,
        num_heads=num_heads, head_dim=head_dim, q_tile=tq, causal=causal_mask)

    def wspec(w):
        z = (0,) * w.ndim
        return pl.BlockSpec(w.shape, lambda b, q, _z=z: _z)

    for raw in params:
        packed = _pack_layer_params(raw, num_heads, head_dim, compute_dtype)
        x = pl.pallas_call(
            kernel,
            out_shape=jax.ShapeDtypeStruct((B, S, D), x.dtype),
            grid_spec=pltpu.PrefetchScalarGridSpec(
                num_scalar_prefetch=0,
                grid=(B, nq),
                in_specs=[
                    pl.BlockSpec((1, S, D), lambda b, q: (b, 0, 0)),   # full sequence (K/V src + tiles)
                    pl.BlockSpec((1, 1, S), lambda b, q: (b, 0, 0)),   # key-padding bias
                ] + [wspec(w) for w in packed],
                out_specs=pl.BlockSpec((1, tq, D), lambda b, q: (b, q, 0)),
                scratch_shapes=[
                    pltpu.VMEM((num_heads, tq, head_dim), compute_dtype),  # Q (per tile, pre-scaled)
                    pltpu.VMEM((num_heads, S, head_dim), compute_dtype),   # K (full sequence)
                    pltpu.VMEM((num_heads, S, head_dim), compute_dtype),   # V (full sequence)
                ],
            ),
            compiler_params=pltpu.CompilerParams(
                dimension_semantics=("parallel", "arbitrary"),
                vmem_limit_bytes=48 * 1024 * 1024,
            ),
        )(x, mbias, *packed)
    return x


# ----------------------------------------------------------------------------
# Deterministic synthetic parameters (shapes from the module __init__)
# ----------------------------------------------------------------------------
def init_params(key, dim, attn_layers):
    def linear(k, din, dout):
        kw, kb = jax.random.split(k)
        w = jax.random.normal(kw, (din, dout), jnp.float32) / math.sqrt(din)
        b = 0.01 * jax.random.normal(kb, (1, dout), jnp.float32)
        return w, b

    layers = []
    for layer in range(attn_layers):
        ks = jax.random.split(jax.random.fold_in(key, layer), 6)
        ln1_g = jnp.ones((1, dim), jnp.float32)
        ln1_b = jnp.zeros((1, dim), jnp.float32)
        wq, bq = linear(ks[0], dim, dim)
        wk, bk = linear(ks[1], dim, dim)
        wv, bv = linear(ks[2], dim, dim)
        wo, bo = linear(ks[3], dim, dim)
        ln2_g = jnp.ones((1, dim), jnp.float32)
        ln2_b = jnp.zeros((1, dim), jnp.float32)
        w1, b1 = linear(ks[4], dim, 2 * dim)
        w2, b2 = linear(ks[5], 2 * dim, dim)
        layers.append((ln1_g, ln1_b, wq, bq, wk, bk, wv, bv, wo, bo,
                       ln2_g, ln2_b, w1, b1, w2, b2))
    return layers


# ----------------------------------------------------------------------------
# Pure-JAX reference (same math, same bf16 matmul-input recipe)
# ----------------------------------------------------------------------------
def reference_forward(x, mask, params, *, num_heads, head_dim,
                      causal_mask=False, compute_dtype=jnp.bfloat16):
    B, S, D = x.shape
    cd = compute_dtype
    scale = 1.0 / math.sqrt(head_dim)

    def ln(v, g, b):
        mu = v.mean(-1, keepdims=True)
        var = ((v - mu) ** 2).mean(-1, keepdims=True)
        return (v - mu) / jnp.sqrt(var + 1e-5) * g + b

    def mm(a, w):
        return jnp.einsum('...ij,jk->...ik', a.astype(cd), w.astype(cd),
                          preferred_element_type=jnp.float32)

    for (ln1_g, ln1_b, wq, bq, wk, bk, wv, bv, wo, bo,
         ln2_g, ln2_b, w1, b1, w2, b2) in params:
        xn = ln(x, ln1_g, ln1_b)
        q = mm(xn, wq) + bq
        k = mm(xn, wk) + bk
        v = mm(xn, wv) + bv
        qh = q.reshape(B, S, num_heads, head_dim).transpose(0, 2, 1, 3)
        kh = k.reshape(B, S, num_heads, head_dim).transpose(0, 2, 1, 3)
        vh = v.reshape(B, S, num_heads, head_dim).transpose(0, 2, 1, 3)
        s = jnp.einsum('bhqe,bhke->bhqk', (qh * scale).astype(cd), kh.astype(cd),
                       preferred_element_type=jnp.float32)
        s = s + (1.0 - mask)[:, None, None, :] * (-1e9)
        if causal_mask:
            row = lax.broadcasted_iota(jnp.int32, (S, S), 0)
            col = lax.broadcasted_iota(jnp.int32, (S, S), 1)
            s = s + jnp.where(col <= row, 0.0, -1e9)
        p = jax.nn.softmax(s, axis=-1)
        o = jnp.einsum('bhqk,bhke->bhqe', p.astype(cd), vh.astype(cd),
                       preferred_element_type=jnp.float32)
        o = o.transpose(0, 2, 1, 3).reshape(B, S, D)
        x = x + mm(o, wo) + bo
        xn2 = ln(x, ln2_g, ln2_b)
        h = jax.nn.gelu(mm(xn2, w1) + b1, approximate=False)
        x = x + mm(h, w2) + b2
    return x


if __name__ == "__main__":
    key = jax.random.PRNGKey(0)
    k_x, k_p = jax.random.split(key)

    # Small shapes consistent with the module: head_dim * num_heads = input_dim.
    B, S = 2, 16
    head_dim, num_heads, attn_layers = 8, 4, 2
    D = head_dim * num_heads  # 32

    x = jax.random.normal(k_x, (B, S, D), jnp.float32)
    # Key-validity mask: sequence 0 fully valid, sequence 1 has 5 padded keys.
    lengths = jnp.array([S, S - 5])
    mask = (jnp.arange(S)[None, :] < lengths[:, None]).astype(jnp.float32)

    params = init_params(k_p, D, attn_layers)

    for causal in (False, True):
        out = transformer_forward(x, mask, params,
                                  num_heads=num_heads, head_dim=head_dim,
                                  causal_mask=causal)
        out = jax.block_until_ready(out)
        ref = reference_forward(x, mask, params,
                                num_heads=num_heads, head_dim=head_dim,
                                causal_mask=causal)
        assert out.shape == (B, S, D)
        err = float(jnp.max(jnp.abs(out - ref)))
        assert jnp.allclose(out, ref, atol=2e-2, rtol=2e-2), err

    print("KERNEL_OK")
</pallas_src>

<mosaic_0001>
module attributes {stable_mosaic.version = 11 : i64} {
  func.func @transformer_layer_kernel(%arg0: i32, %arg1: i32, %arg2: memref<1x16x32xf32, #tpu.memory_space<vmem>>, %arg3: memref<1x1x16xf32, #tpu.memory_space<vmem>>, %arg4: memref<1x32xf32, #tpu.memory_space<vmem>>, %arg5: memref<1x32xf32, #tpu.memory_space<vmem>>, %arg6: memref<32x32xbf16, #tpu.memory_space<vmem>>, %arg7: memref<1x32xf32, #tpu.memory_space<vmem>>, %arg8: memref<32x64xbf16, #tpu.memory_space<vmem>>, %arg9: memref<1x64xf32, #tpu.memory_space<vmem>>, %arg10: memref<4x8x32xbf16, #tpu.memory_space<vmem>>, %arg11: memref<1x32xf32, #tpu.memory_space<vmem>>, %arg12: memref<1x32xf32, #tpu.memory_space<vmem>>, %arg13: memref<1x32xf32, #tpu.memory_space<vmem>>, %arg14: memref<32x64xbf16, #tpu.memory_space<vmem>>, %arg15: memref<1x64xf32, #tpu.memory_space<vmem>>, %arg16: memref<64x32xbf16, #tpu.memory_space<vmem>>, %arg17: memref<1x32xf32, #tpu.memory_space<vmem>>, %arg18: memref<1x8x32xf32, #tpu.memory_space<vmem>>, %arg19: memref<4x8x8xbf16, #tpu.memory_space<vmem>>, %arg20: memref<4x16x8xbf16, #tpu.memory_space<vmem>>, %arg21: memref<4x16x8xbf16, #tpu.memory_space<vmem>>) attributes {dimension_semantics = [#tpu.dimension_semantics<parallel>, #tpu.dimension_semantics<arbitrary>], iteration_bounds = array<i64: 2, 2>, scalar_prefetch = 0 : i64, scratch_operands = 3 : i64, tpu.core_type = #tpu.core_type<tc>, window_params = [{transform_indices = @transform_0, window_bounds = array<i64: 1, 16, 32>}, {transform_indices = @transform_1, window_bounds = array<i64: 1, 1, 16>}, {pipeline_mode = #tpu.pipeline_mode<synchronous>, transform_indices = @transform_2, window_bounds = array<i64: 1, 32>}, {pipeline_mode = #tpu.pipeline_mode<synchronous>, transform_indices = @transform_3, window_bounds = array<i64: 1, 32>}, {pipeline_mode = #tpu.pipeline_mode<synchronous>, transform_indices = @transform_4, window_bounds = array<i64: 32, 32>}, {pipeline_mode = #tpu.pipeline_mode<synchronous>, transform_indices = @transform_5, window_bounds = array<i64: 1, 32>}, {pipeline_mode = #tpu.pipeline_mode<synchronous>, transform_indices = @transform_6, window_bounds = array<i64: 32, 64>}, {pipeline_mode = #tpu.pipeline_mode<synchronous>, transform_indices = @transform_7, window_bounds = array<i64: 1, 64>}, {pipeline_mode = #tpu.pipeline_mode<synchronous>, transform_indices = @transform_8, window_bounds = array<i64: 4, 8, 32>}, {pipeline_mode = #tpu.pipeline_mode<synchronous>, transform_indices = @transform_9, window_bounds = array<i64: 1, 32>}, {pipeline_mode = #tpu.pipeline_mode<synchronous>, transform_indices = @transform_10, window_bounds = array<i64: 1, 32>}, {pipeline_mode = #tpu.pipeline_mode<synchronous>, transform_indices = @transform_11, window_bounds = array<i64: 1, 32>}, {pipeline_mode = #tpu.pipeline_mode<synchronous>, transform_indices = @transform_12, window_bounds = array<i64: 32, 64>}, {pipeline_mode = #tpu.pipeline_mode<synchronous>, transform_indices = @transform_13, window_bounds = array<i64: 1, 64>}, {pipeline_mode = #tpu.pipeline_mode<synchronous>, transform_indices = @transform_14, window_bounds = array<i64: 64, 32>}, {pipeline_mode = #tpu.pipeline_mode<synchronous>, transform_indices = @transform_15, window_bounds = array<i64: 1, 32>}, {transform_indices = @transform_16, window_bounds = array<i64: 1, 8, 32>}]} {
    %c0_i32 = arith.constant 0 : i32
    %0 = arith.cmpi eq, %arg1, %c0_i32 : i32
    %1 = arith.extui %0 : i1 to i32
    %c0_i32_0 = arith.constant 0 : i32
    %2 = arith.cmpi ne, %1, %c0_i32_0 : i32
    scf.if %2 {
      %c0_84 = arith.constant 0 : index
      %c0_85 = arith.constant 0 : index
      %c0_86 = arith.constant 0 : index
      %157 = vector.load %arg2[%c0_84, %c0_85, %c0_86] : memref<1x16x32xf32, #tpu.memory_space<vmem>>, vector<1x16x32xf32>
      %158 = vector.shape_cast %157 : vector<1x16x32xf32> to vector<16x32xf32>
      %c0_87 = arith.constant 0 : index
      %c0_88 = arith.constant 0 : index
      %159 = vector.load %arg4[%c0_87, %c0_88] : memref<1x32xf32, #tpu.memory_space<vmem>>, vector<1x32xf32>
      %c0_89 = arith.constant 0 : index
      %c0_90 = arith.constant 0 : index
      %160 = vector.load %arg5[%c0_89, %c0_90] : memref<1x32xf32, #tpu.memory_space<vmem>>, vector<1x32xf32>
      %cst_91 = arith.constant dense<0.000000e+00> : vector<16xf32>
      %161 = vector.multi_reduction <add>, %158, %cst_91 [1] : vector<16x32xf32> to vector<16xf32>
      %162 = vector.shape_cast %161 : vector<16xf32> to vector<16x1xf32>
      %cst_92 = arith.constant 3.200000e+01 : f32
      %163 = vector.broadcast %cst_92 : f32 to vector<16x1xf32>
      %164 = arith.divf %162, %163 : vector<16x1xf32>
      %165 = vector.broadcast %164 : vector<16x1xf32> to vector<16x32xf32>
      %166 = arith.subf %158, %165 : vector<16x32xf32>
      %167 = arith.mulf %166, %166 : vector<16x32xf32>
      %cst_93 = arith.constant dense<0.000000e+00> : vector<16xf32>
      %168 = vector.multi_reduction <add>, %167, %cst_93 [1] : vector<16x32xf32> to vector<16xf32>
      %169 = vector.shape_cast %168 : vector<16xf32> to vector<16x1xf32>
      %cst_94 = arith.constant 3.200000e+01 : f32
      %170 = vector.broadcast %cst_94 : f32 to vector<16x1xf32>
      %171 = arith.divf %169, %170 : vector<16x1xf32>
      %172 = vector.broadcast %164 : vector<16x1xf32> to vector<16x32xf32>
      %173 = arith.subf %158, %172 : vector<16x32xf32>
      %cst_95 = arith.constant 9.99999974E-6 : f32
      %174 = vector.broadcast %cst_95 : f32 to vector<16x1xf32>
      %175 = arith.addf %171, %174 : vector<16x1xf32>
      %176 = math.rsqrt %175 : vector<16x1xf32>
      %177 = vector.broadcast %176 : vector<16x1xf32> to vector<16x32xf32>
      %178 = arith.mulf %173, %177 : vector<16x32xf32>
      %179 = vector.broadcast %159 : vector<1x32xf32> to vector<16x32xf32>
      %180 = arith.mulf %178, %179 : vector<16x32xf32>
      %181 = vector.broadcast %160 : vector<1x32xf32> to vector<16x32xf32>
      %182 = arith.addf %180, %181 : vector<16x32xf32>
      %183 = arith.truncf %182 : vector<16x32xf32> to vector<16x32xbf16>
      %c0_96 = arith.constant 0 : index
      %c0_97 = arith.constant 0 : index
      %184 = vector.load %arg8[%c0_96, %c0_97] : memref<32x64xbf16, #tpu.memory_space<vmem>>, vector<32x64xbf16>
      %cst_98 = arith.constant dense<0.000000e+00> : vector<16x64xf32>
      %185 = tpu.matmul %183, %184, %cst_98 {dimension_numbers = #tpu.dot_dimension_numbers<[1], [0], [0], [1], [0, 0, 1, 1], [], []>} : vector<16x32xbf16>, vector<32x64xbf16>, vector<16x64xf32> -> vector<16x64xf32>
      %c0_99 = arith.constant 0 : index
      %c0_100 = arith.constant 0 : index
      %186 = vector.load %arg9[%c0_99, %c0_100] : memref<1x64xf32, #tpu.memory_space<vmem>>, vector<1x64xf32>
      %187 = vector.broadcast %186 : vector<1x64xf32> to vector<16x64xf32>
      %188 = arith.addf %185, %187 : vector<16x64xf32>
      %189 = vector.extract_strided_slice %188 {offsets = [0, 0], sizes = [16, 8], strides = [1, 1]} : vector<16x64xf32> to vector<16x8xf32>
      %190 = arith.truncf %189 : vector<16x8xf32> to vector<16x8xbf16>
      %c0_101 = arith.constant 0 : index
      %c0_102 = arith.constant 0 : index
      %c0_103 = arith.constant 0 : index
      %191 = vector.load %arg20[%c0_101, %c0_102, %c0_103] : memref<4x16x8xbf16, #tpu.memory_space<vmem>>, vector<1x16x8xbf16>
      %192 = vector.shape_cast %191 : vector<1x16x8xbf16> to vector<16x8xbf16>
      %193 = vector.shape_cast %190 : vector<16x8xbf16> to vector<1x16x8xbf16>
      tpu.vector_store %arg20[%c0_101, %c0_102, %c0_103], %193 {strides = array<i32>} : memref<4x16x8xbf16, #tpu.memory_space<vmem>>, vector<1x16x8xbf16>,
      %194 = vector.extract_strided_slice %188 {offsets = [0, 32], sizes = [16, 8], strides = [1, 1]} : vector<16x64xf32> to vector<16x8xf32>
      %195 = arith.truncf %194 : vector<16x8xf32> to vector<16x8xbf16>
      %c0_104 = arith.constant 0 : index
      %c0_105 = arith.constant 0 : index
      %c0_106 = arith.constant 0 : index
      %196 = vector.load %arg21[%c0_104, %c0_105, %c0_106] : memref<4x16x8xbf16, #tpu.memory_space<vmem>>, vector<1x16x8xbf16>
      %197 = vector.shape_cast %196 : vector<1x16x8xbf16> to vector<16x8xbf16>
      %198 = vector.shape_cast %195 : vector<16x8xbf16> to vector<1x16x8xbf16>
      tpu.vector_store %arg21[%c0_104, %c0_105, %c0_106], %198 {strides = array<i32>} : memref<4x16x8xbf16, #tpu.memory_space<vmem>>, vector<1x16x8xbf16>,
      %199 = vector.extract_strided_slice %188 {offsets = [0, 8], sizes = [16, 8], strides = [1, 1]} : vector<16x64xf32> to vector<16x8xf32>
      %200 = arith.truncf %199 : vector<16x8xf32> to vector<16x8xbf16>
      %c1_107 = arith.constant 1 : index
      %c0_108 = arith.constant 0 : index
      %c0_109 = arith.constant 0 : index
      %201 = vector.load %arg20[%c1_107, %c0_108, %c0_109] : memref<4x16x8xbf16, #tpu.memory_space<vmem>>, vector<1x16x8xbf16>
      %202 = vector.shape_cast %201 : vector<1x16x8xbf16> to vector<16x8xbf16>
      %203 = vector.shape_cast %200 : vector<16x8xbf16> to vector<1x16x8xbf16>
      tpu.vector_store %arg20[%c1_107, %c0_108, %c0_109], %203 {strides = array<i32>} : memref<4x16x8xbf16, #tpu.memory_space<vmem>>, vector<1x16x8xbf16>,
      %204 = vector.extract_strided_slice %188 {offsets = [0, 40], sizes = [16, 8], strides = [1, 1]} : vector<16x64xf32> to vector<16x8xf32>
      %205 = arith.truncf %204 : vector<16x8xf32> to vector<16x8xbf16>
      %c1_110 = arith.constant 1 : index
      %c0_111 = arith.constant 0 : index
      %c0_112 = arith.constant 0 : index
      %206 = vector.load %arg21[%c1_110, %c0_111, %c0_112] : memref<4x16x8xbf16, #tpu.memory_space<vmem>>, vector<1x16x8xbf16>
      %207 = vector.shape_cast %206 : vector<1x16x8xbf16> to vector<16x8xbf16>
      %208 = vector.shape_cast %205 : vector<16x8xbf16> to vector<1x16x8xbf16>
      tpu.vector_store %arg21[%c1_110, %c0_111, %c0_112], %208 {strides = array<i32>} : memref<4x16x8xbf16, #tpu.memory_space<vmem>>, vector<1x16x8xbf16>,
      %209 = vector.extract_strided_slice %188 {offsets = [0, 16], sizes = [16, 8], strides = [1, 1]} : vector<16x64xf32> to vector<16x8xf32>
      %210 = arith.truncf %209 : vector<16x8xf32> to vector<16x8xbf16>
      %c2_113 = arith.constant 2 : index
      %c0_114 = arith.constant 0 : index
      %c0_115 = arith.constant 0 : index
      %211 = vector.load %arg20[%c2_113, %c0_114, %c0_115] : memref<4x16x8xbf16, #tpu.memory_space<vmem>>, vector<1x16x8xbf16>
      %212 = vector.shape_cast %211 : vector<1x16x8xbf16> to vector<16x8xbf16>
      %213 = vector.shape_cast %210 : vector<16x8xbf16> to vector<1x16x8xbf16>
      tpu.vector_store %arg20[%c2_113, %c0_114, %c0_115], %213 {strides = array<i32>} : memref<4x16x8xbf16, #tpu.memory_space<vmem>>, vector<1x16x8xbf16>,
      %214 = vector.extract_strided_slice %188 {offsets = [0, 48], sizes = [16, 8], strides = [1, 1]} : vector<16x64xf32> to vector<16x8xf32>
      %215 = arith.truncf %214 : vector<16x8xf32> to vector<16x8xbf16>
      %c2_116 = arith.constant 2 : index
      %c0_117 = arith.constant 0 : index
      %c0_118 = arith.constant 0 : index
      %216 = vector.load %arg21[%c2_116, %c0_117, %c0_118] : memref<4x16x8xbf16, #tpu.memory_space<vmem>>, vector<1x16x8xbf16>
      %217 = vector.shape_cast %216 : vector<1x16x8xbf16> to vector<16x8xbf16>
      %218 = vector.shape_cast %215 : vector<16x8xbf16> to vector<1x16x8xbf16>
      tpu.vector_store %arg21[%c2_116, %c0_117, %c0_118], %218 {strides = array<i32>} : memref<4x16x8xbf16, #tpu.memory_space<vmem>>, vector<1x16x8xbf16>,
      %219 = vector.extract_strided_slice %188 {offsets = [0, 24], sizes = [16, 8], strides = [1, 1]} : vector<16x64xf32> to vector<16x8xf32>
      %220 = arith.truncf %219 : vector<16x8xf32> to vector<16x8xbf16>
      %c3_119 = arith.constant 3 : index
      %c0_120 = arith.constant 0 : index
      %c0_121 = arith.constant 0 : index
      %221 = vector.load %arg20[%c3_119, %c0_120, %c0_121] : memref<4x16x8xbf16, #tpu.memory_space<vmem>>, vector<1x16x8xbf16>
      %222 = vector.shape_cast %221 : vector<1x16x8xbf16> to vector<16x8xbf16>
      %223 = vector.shape_cast %220 : vector<16x8xbf16> to vector<1x16x8xbf16>
      tpu.vector_store %arg20[%c3_119, %c0_120, %c0_121], %223 {strides = array<i32>} : memref<4x16x8xbf16, #tpu.memory_space<vmem>>, vector<1x16x8xbf16>,
      %224 = vector.extract_strided_slice %188 {offsets = [0, 56], sizes = [16, 8], strides = [1, 1]} : vector<16x64xf32> to vector<16x8xf32>
      %225 = arith.truncf %224 : vector<16x8xf32> to vector<16x8xbf16>
      %c3_122 = arith.constant 3 : index
      %c0_123 = arith.constant 0 : index
      %c0_124 = arith.constant 0 : index
      %226 = vector.load %arg21[%c3_122, %c0_123, %c0_124] : memref<4x16x8xbf16, #tpu.memory_space<vmem>>, vector<1x16x8xbf16>
      %227 = vector.shape_cast %226 : vector<1x16x8xbf16> to vector<16x8xbf16>
      %228 = vector.shape_cast %225 : vector<16x8xbf16> to vector<1x16x8xbf16>
      tpu.vector_store %arg21[%c3_122, %c0_123, %c0_124], %228 {strides = array<i32>} : memref<4x16x8xbf16, #tpu.memory_space<vmem>>, vector<1x16x8xbf16>,
    } else {
    }
    %c8_i32 = arith.constant 8 : i32
    %3 = arith.muli %arg1, %c8_i32 : i32
    %4 = tpu.assume_multiple %3, 8 : i32
    %c0 = arith.constant 0 : index
    %5 = arith.index_cast %4 : i32 to index
    %c0_1 = arith.constant 0 : index
    %6 = vector.load %arg2[%c0, %5, %c0_1] : memref<1x16x32xf32, #tpu.memory_space<vmem>>, vector<1x8x32xf32>
    %7 = vector.shape_cast %6 : vector<1x8x32xf32> to vector<8x32xf32>
    %c0_2 = arith.constant 0 : index
    %c0_3 = arith.constant 0 : index
    %8 = vector.load %arg4[%c0_2, %c0_3] : memref<1x32xf32, #tpu.memory_space<vmem>>, vector<1x32xf32>
    %c0_4 = arith.constant 0 : index
    %c0_5 = arith.constant 0 : index
    %9 = vector.load %arg5[%c0_4, %c0_5] : memref<1x32xf32, #tpu.memory_space<vmem>>, vector<1x32xf32>
    %cst = arith.constant dense<0.000000e+00> : vector<8xf32>
    %10 = vector.multi_reduction <add>, %7, %cst [1] : vector<8x32xf32> to vector<8xf32>
    %11 = vector.shape_cast %10 : vector<8xf32> to vector<8x1xf32>
    %cst_6 = arith.constant 3.200000e+01 : f32
    %12 = vector.broadcast %cst_6 : f32 to vector<8x1xf32>
    %13 = arith.divf %11, %12 : vector<8x1xf32>
    %14 = vector.broadcast %13 : vector<8x1xf32> to vector<8x32xf32>
    %15 = arith.subf %7, %14 : vector<8x32xf32>
    %16 = arith.mulf %15, %15 : vector<8x32xf32>
    %cst_7 = arith.constant dense<0.000000e+00> : vector<8xf32>
    %17 = vector.multi_reduction <add>, %16, %cst_7 [1] : vector<8x32xf32> to vector<8xf32>
    %18 = vector.shape_cast %17 : vector<8xf32> to vector<8x1xf32>
    %cst_8 = arith.constant 3.200000e+01 : f32
    %19 = vector.broadcast %cst_8 : f32 to vector<8x1xf32>
    %20 = arith.divf %18, %19 : vector<8x1xf32>
    %21 = vector.broadcast %13 : vector<8x1xf32> to vector<8x32xf32>
    %22 = arith.subf %7, %21 : vector<8x32xf32>
    %cst_9 = arith.constant 9.99999974E-6 : f32
    %23 = vector.broadcast %cst_9 : f32 to vector<8x1xf32>
    %24 = arith.addf %20, %23 : vector<8x1xf32>
    %25 = math.rsqrt %24 : vector<8x1xf32>
    %26 = vector.broadcast %25 : vector<8x1xf32> to vector<8x32xf32>
    %27 = arith.mulf %22, %26 : vector<8x32xf32>
    %28 = vector.broadcast %8 : vector<1x32xf32> to vector<8x32xf32>
    %29 = arith.mulf %27, %28 : vector<8x32xf32>
    %30 = vector.broadcast %9 : vector<1x32xf32> to vector<8x32xf32>
    %31 = arith.addf %29, %30 : vector<8x32xf32>
    %32 = arith.truncf %31 : vector<8x32xf32> to vector<8x32xbf16>
    %c0_10 = arith.constant 0 : index
    %c0_11 = arith.constant 0 : index
    %33 = vector.load %arg6[%c0_10, %c0_11] : memref<32x32xbf16, #tpu.memory_space<vmem>>, vector<32x32xbf16>
    %cst_12 = arith.constant dense<0.000000e+00> : vector<8x32xf32>
    %34 = tpu.matmul %32, %33, %cst_12 {dimension_numbers = #tpu.dot_dimension_numbers<[1], [0], [0], [1], [0, 0, 1, 1], [], []>} : vector<8x32xbf16>, vector<32x32xbf16>, vector<8x32xf32> -> vector<8x32xf32>
    %c0_13 = arith.constant 0 : index
    %c0_14 = arith.constant 0 : index
    %35 = vector.load %arg7[%c0_13, %c0_14] : memref<1x32xf32, #tpu.memory_space<vmem>>, vector<1x32xf32>
    %36 = vector.broadcast %35 : vector<1x32xf32> to vector<8x32xf32>
    %37 = arith.addf %34, %36 : vector<8x32xf32>
    %cst_15 = arith.constant 0.353553385 : f32
    %38 = vector.broadcast %cst_15 : f32 to vector<8x32xf32>
    %39 = arith.mulf %37, %38 : vector<8x32xf32>
    %40 = vector.extract_strided_slice %39 {offsets = [0, 0], sizes = [8, 8], strides = [1, 1]} : vector<8x32xf32> to vector<8x8xf32>
    %41 = arith.truncf %40 : vector<8x8xf32> to vector<8x8xbf16>
    %c0_16 = arith.constant 0 : index
    %c0_17 = arith.constant 0 : index
    %c0_18 = arith.constant 0 : index
    %42 = vector.load %arg19[%c0_16, %c0_17, %c0_18] : memref<4x8x8xbf16, #tpu.memory_space<vmem>>, vector<1x8x8xbf16>
    %43 = vector.shape_cast %42 : vector<1x8x8xbf16> to vector<8x8xbf16>
    %44 = vector.shape_cast %41 : vector<8x8xbf16> to vector<1x8x8xbf16>
    tpu.vector_store %arg19[%c0_16, %c0_17, %c0_18], %44 {strides = array<i32>} : memref<4x8x8xbf16, #tpu.memory_space<vmem>>, vector<1x8x8xbf16>,
    %45 = vector.extract_strided_slice %39 {offsets = [0, 8], sizes = [8, 8], strides = [1, 1]} : vector<8x32xf32> to vector<8x8xf32>
    %46 = arith.truncf %45 : vector<8x8xf32> to vector<8x8xbf16>
    %c1 = arith.constant 1 : index
    %c0_19 = arith.constant 0 : index
    %c0_20 = arith.constant 0 : index
    %47 = vector.load %arg19[%c1, %c0_19, %c0_20] : memref<4x8x8xbf16, #tpu.memory_space<vmem>>, vector<1x8x8xbf16>
    %48 = vector.shape_cast %47 : vector<1x8x8xbf16> to vector<8x8xbf16>
    %49 = vector.shape_cast %46 : vector<8x8xbf16> to vector<1x8x8xbf16>
    tpu.vector_store %arg19[%c1, %c0_19, %c0_20], %49 {strides = array<i32>} : memref<4x8x8xbf16, #tpu.memory_space<vmem>>, vector<1x8x8xbf16>,
    %50 = vector.extract_strided_slice %39 {offsets = [0, 16], sizes = [8, 8], strides = [1, 1]} : vector<8x32xf32> to vector<8x8xf32>
    %51 = arith.truncf %50 : vector<8x8xf32> to vector<8x8xbf16>
    %c2 = arith.constant 2 : index
    %c0_21 = arith.constant 0 : index
    %c0_22 = arith.constant 0 : index
    %52 = vector.load %arg19[%c2, %c0_21, %c0_22] : memref<4x8x8xbf16, #tpu.memory_space<vmem>>, vector<1x8x8xbf16>
    %53 = vector.shape_cast %52 : vector<1x8x8xbf16> to vector<8x8xbf16>
    %54 = vector.shape_cast %51 : vector<8x8xbf16> to vector<1x8x8xbf16>
    tpu.vector_store %arg19[%c2, %c0_21, %c0_22], %54 {strides = array<i32>} : memref<4x8x8xbf16, #tpu.memory_space<vmem>>, vector<1x8x8xbf16>,
    %55 = vector.extract_strided_slice %39 {offsets = [0, 24], sizes = [8, 8], strides = [1, 1]} : vector<8x32xf32> to vector<8x8xf32>
    %56 = arith.truncf %55 : vector<8x8xf32> to vector<8x8xbf16>
    %c3 = arith.constant 3 : index
    %c0_23 = arith.constant 0 : index
    %c0_24 = arith.constant 0 : index
    %57 = vector.load %arg19[%c3, %c0_23, %c0_24] : memref<4x8x8xbf16, #tpu.memory_space<vmem>>, vector<1x8x8xbf16>
    %58 = vector.shape_cast %57 : vector<1x8x8xbf16> to vector<8x8xbf16>
    %59 = vector.shape_cast %56 : vector<8x8xbf16> to vector<1x8x8xbf16>
    tpu.vector_store %arg19[%c3, %c0_23, %c0_24], %59 {strides = array<i32>} : memref<4x8x8xbf16, #tpu.memory_space<vmem>>, vector<1x8x8xbf16>,
    %c0_25 = arith.constant 0 : index
    %c0_26 = arith.constant 0 : index
    %c0_27 = arith.constant 0 : index
    %60 = vector.load %arg19[%c0_25, %c0_26, %c0_27] : memref<4x8x8xbf16, #tpu.memory_space<vmem>>, vector<4x8x8xbf16>
    %c0_28 = arith.constant 0 : index
    %c0_29 = arith.constant 0 : index
    %c0_30 = arith.constant 0 : index
    %61 = vector.load %arg20[%c0_28, %c0_29, %c0_30] : memref<4x16x8xbf16, #tpu.memory_space<vmem>>, vector<4x16x8xbf16>
    "tpu.trace_start"() <{level = 10 : i32, message = "hqd,hkd->hqk"}> : () -> ()
    %cst_31 = arith.constant dense<0.000000e+00> : vector<4x8x16xf32>
    %62 = tpu.matmul %60, %61, %cst_31 {dimension_numbers = #tpu.dot_dimension_numbers<[2], [2], [1], [1], [0, 0, 0, 1, 1, 1], [0], [0]>} : vector<4x8x8xbf16>, vector<4x16x8xbf16>, vector<4x8x16xf32> -> vector<4x8x16xf32>
    "tpu.trace_stop"() : () -> ()
    %c0_32 = arith.constant 0 : index
    %c0_33 = arith.constant 0 : index
    %c0_34 = arith.constant 0 : index
    %63 = vector.load %arg3[%c0_32, %c0_33, %c0_34] : memref<1x1x16xf32, #tpu.memory_space<vmem>>, vector<1x1x16xf32>
    %64 = vector.shape_cast %63 : vector<1x1x16xf32> to vector<1x16xf32>
    %65 = vector.shape_cast %64 : vector<1x16xf32> to vector<1x1x16xf32>
    %66 = vector.broadcast %65 : vector<1x1x16xf32> to vector<4x8x16xf32>
    %67 = arith.addf %62, %66 : vector<4x8x16xf32>
    %cst_35 = arith.constant dense<0xFF800000> : vector<4x8xf32>
    %68 = vector.multi_reduction <maximumf>, %67, %cst_35 [2] : vector<4x8x16xf32> to vector<4x8xf32>
    %69 = vector.shape_cast %68 : vector<4x8xf32> to vector<4x8x1xf32>
    %70 = vector.broadcast %69 : vector<4x8x1xf32> to vector<4x8x16xf32>
    %71 = arith.subf %67, %70 : vector<4x8x16xf32>
    %72 = math.exp %71 : vector<4x8x16xf32>
    %cst_36 = arith.constant dense<0.000000e+00> : vector<4x8xf32>
    %73 = vector.multi_reduction <add>, %72, %cst_36 [2] : vector<4x8x16xf32> to vector<4x8xf32>
    %74 = vector.shape_cast %73 : vector<4x8xf32> to vector<4x8x1xf32>
    %75 = arith.truncf %72 : vector<4x8x16xf32> to vector<4x8x16xbf16>
    %c0_37 = arith.constant 0 : index
    %c0_38 = arith.constant 0 : index
    %c0_39 = arith.constant 0 : index
    %76 = vector.load %arg21[%c0_37, %c0_38, %c0_39] : memref<4x16x8xbf16, #tpu.memory_space<vmem>>, vector<4x16x8xbf16>
    "tpu.trace_start"() <{level = 10 : i32, message = "hqk,hkd->hqd"}> : () -> ()
    %cst_40 = arith.constant dense<0.000000e+00> : vector<4x8x8xf32>
    %77 = tpu.matmul %75, %76, %cst_40 {dimension_numbers = #tpu.dot_dimension_numbers<[2], [1], [1], [2], [0, 0, 0, 1, 1, 2], [0], [0]>} : vector<4x8x16xbf16>, vector<4x16x8xbf16>, vector<4x8x8xf32> -> vector<4x8x8xf32>
    "tpu.trace_stop"() : () -> ()
    %78 = tpu.reciprocal %74 {approx = true} : vector<4x8x1xf32> -> vector<4x8x1xf32>
    %79 = vector.broadcast %78 : vector<4x8x1xf32> to vector<4x8x8xf32>
    %80 = arith.mulf %77, %79 : vector<4x8x8xf32>
    %81 = arith.truncf %80 : vector<4x8x8xf32> to vector<4x8x8xbf16>
    %82 = vector.extract_strided_slice %81 {offsets = [0, 0, 0], sizes = [1, 8, 8], strides = [1, 1, 1]} : vector<4x8x8xbf16> to vector<1x8x8xbf16>
    %83 = vector.shape_cast %82 : vector<1x8x8xbf16> to vector<8x8xbf16>
    %c0_41 = arith.constant 0 : index
    %c0_42 = arith.constant 0 : index
    %c0_43 = arith.constant 0 : index
    %84 = vector.load %arg10[%c0_41, %c0_42, %c0_43] : memref<4x8x32xbf16, #tpu.memory_space<vmem>>, vector<1x8x32xbf16>
    %85 = vector.shape_cast %84 : vector<1x8x32xbf16> to vector<8x32xbf16>
    %cst_44 = arith.constant dense<0.000000e+00> : vector<8x32xf32>
    %86 = tpu.matmul %83, %85, %cst_44 {dimension_numbers = #tpu.dot_dimension_numbers<[1], [0], [0], [1], [0, 0, 1, 1], [], []>} : vector<8x8xbf16>, vector<8x32xbf16>, vector<8x32xf32> -> vector<8x32xf32>
    %87 = vector.extract_strided_slice %81 {offsets = [1, 0, 0], sizes = [1, 8, 8], strides = [1, 1, 1]} : vector<4x8x8xbf16> to vector<1x8x8xbf16>
    %88 = vector.shape_cast %87 : vector<1x8x8xbf16> to vector<8x8xbf16>
    %c1_45 = arith.constant 1 : index
    %c0_46 = arith.constant 0 : index
    %c0_47 = arith.constant 0 : index
    %89 = vector.load %arg10[%c1_45, %c0_46, %c0_47] : memref<4x8x32xbf16, #tpu.memory_space<vmem>>, vector<1x8x32xbf16>
    %90 = vector.shape_cast %89 : vector<1x8x32xbf16> to vector<8x32xbf16>
    %cst_48 = arith.constant dense<0.000000e+00> : vector<8x32xf32>
    %91 = tpu.matmul %88, %90, %cst_48 {dimension_numbers = #tpu.dot_dimension_numbers<[1], [0], [0], [1], [0, 0, 1, 1], [], []>} : vector<8x8xbf16>, vector<8x32xbf16>, vector<8x32xf32> -> vector<8x32xf32>
    %92 = arith.addf %86, %91 : vector<8x32xf32>
    %93 = vector.extract_strided_slice %81 {offsets = [2, 0, 0], sizes = [1, 8, 8], strides = [1, 1, 1]} : vector<4x8x8xbf16> to vector<1x8x8xbf16>
    %94 = vector.shape_cast %93 : vector<1x8x8xbf16> to vector<8x8xbf16>
    %c2_49 = arith.constant 2 : index
    %c0_50 = arith.constant 0 : index
    %c0_51 = arith.constant 0 : index
    %95 = vector.load %arg10[%c2_49, %c0_50, %c0_51] : memref<4x8x32xbf16, #tpu.memory_space<vmem>>, vector<1x8x32xbf16>
    %96 = vector.shape_cast %95 : vector<1x8x32xbf16> to vector<8x32xbf16>
    %cst_52 = arith.constant dense<0.000000e+00> : vector<8x32xf32>
    %97 = tpu.matmul %94, %96, %cst_52 {dimension_numbers = #tpu.dot_dimension_numbers<[1], [0], [0], [1], [0, 0, 1, 1], [], []>} : vector<8x8xbf16>, vector<8x32xbf16>, vector<8x32xf32> -> vector<8x32xf32>
    %98 = arith.addf %92, %97 : vector<8x32xf32>
    %99 = vector.extract_strided_slice %81 {offsets = [3, 0, 0], sizes = [1, 8, 8], strides = [1, 1, 1]} : vector<4x8x8xbf16> to vector<1x8x8xbf16>
    %100 = vector.shape_cast %99 : vector<1x8x8xbf16> to vector<8x8xbf16>
    %c3_53 = arith.constant 3 : index
    %c0_54 = arith.constant 0 : index
    %c0_55 = arith.constant 0 : index
    %101 = vector.load %arg10[%c3_53, %c0_54, %c0_55] : memref<4x8x32xbf16, #tpu.memory_space<vmem>>, vector<1x8x32xbf16>
    %102 = vector.shape_cast %101 : vector<1x8x32xbf16> to vector<8x32xbf16>
    %cst_56 = arith.constant dense<0.000000e+00> : vector<8x32xf32>
    %103 = tpu.matmul %100, %102, %cst_56 {dimension_numbers = #tpu.dot_dimension_numbers<[1], [0], [0], [1], [0, 0, 1, 1], [], []>} : vector<8x8xbf16>, vector<8x32xbf16>, vector<8x32xf32> -> vector<8x32xf32>
    %104 = arith.addf %98, %103 : vector<8x32xf32>
    %105 = arith.addf %7, %104 : vector<8x32xf32>
    %c0_57 = arith.constant 0 : index
    %c0_58 = arith.constant 0 : index
    %106 = vector.load %arg11[%c0_57, %c0_58] : memref<1x32xf32, #tpu.memory_space<vmem>>, vector<1x32xf32>
    %107 = vector.broadcast %106 : vector<1x32xf32> to vector<8x32xf32>
    %108 = arith.addf %105, %107 : vector<8x32xf32>
    %c0_59 = arith.constant 0 : index
    %c0_60 = arith.constant 0 : index
    %109 = vector.load %arg12[%c0_59, %c0_60] : memref<1x32xf32, #tpu.memory_space<vmem>>, vector<1x32xf32>
    %c0_61 = arith.constant 0 : index
    %c0_62 = arith.constant 0 : index
    %110 = vector.load %arg13[%c0_61, %c0_62] : memref<1x32xf32, #tpu.memory_space<vmem>>, vector<1x32xf32>
    %cst_63 = arith.constant dense<0.000000e+00> : vector<8xf32>
    %111 = vector.multi_reduction <add>, %108, %cst_63 [1] : vector<8x32xf32> to vector<8xf32>
    %112 = vector.shape_cast %111 : vector<8xf32> to vector<8x1xf32>
    %cst_64 = arith.constant 3.200000e+01 : f32
    %113 = vector.broadcast %cst_64 : f32 to vector<8x1xf32>
    %114 = arith.divf %112, %113 : vector<8x1xf32>
    %115 = vector.broadcast %114 : vector<8x1xf32> to vector<8x32xf32>
    %116 = arith.subf %108, %115 : vector<8x32xf32>
    %117 = arith.mulf %116, %116 : vector<8x32xf32>
    %cst_65 = arith.constant dense<0.000000e+00> : vector<8xf32>
    %118 = vector.multi_reduction <add>, %117, %cst_65 [1] : vector<8x32xf32> to vector<8xf32>
    %119 = vector.shape_cast %118 : vector<8xf32> to vector<8x1xf32>
    %cst_66 = arith.constant 3.200000e+01 : f32
    %120 = vector.broadcast %cst_66 : f32 to vector<8x1xf32>
    %121 = arith.divf %119, %120 : vector<8x1xf32>
    %122 = vector.broadcast %114 : vector<8x1xf32> to vector<8x32xf32>
    %123 = arith.subf %108, %122 : vector<8x32xf32>
    %cst_67 = arith.constant 9.99999974E-6 : f32
    %124 = vector.broadcast %cst_67 : f32 to vector<8x1xf32>
    %125 = arith.addf %121, %124 : vector<8x1xf32>
    %126 = math.rsqrt %125 : vector<8x1xf32>
    %127 = vector.broadcast %126 : vector<8x1xf32> to vector<8x32xf32>
    %128 = arith.mulf %123, %127 : vector<8x32xf32>
    %129 = vector.broadcast %109 : vector<1x32xf32> to vector<8x32xf32>
    %130 = arith.mulf %128, %129 : vector<8x32xf32>
    %131 = vector.broadcast %110 : vector<1x32xf32> to vector<8x32xf32>
    %132 = arith.addf %130, %131 : vector<8x32xf32>
    %133 = arith.truncf %132 : vector<8x32xf32> to vector<8x32xbf16>
    %c0_68 = arith.constant 0 : index
    %c0_69 = arith.constant 0 : index
    %134 = vector.load %arg14[%c0_68, %c0_69] : memref<32x64xbf16, #tpu.memory_space<vmem>>, vector<32x64xbf16>
    %cst_70 = arith.constant dense<0.000000e+00> : vector<8x64xf32>
    %135 = tpu.matmul %133, %134, %cst_70 {dimension_numbers = #tpu.dot_dimension_numbers<[1], [0], [0], [1], [0, 0, 1, 1], [], []>} : vector<8x32xbf16>, vector<32x64xbf16>, vector<8x64xf32> -> vector<8x64xf32>
    %c0_71 = arith.constant 0 : index
    %c0_72 = arith.constant 0 : index
    %136 = vector.load %arg15[%c0_71, %c0_72] : memref<1x64xf32, #tpu.memory_space<vmem>>, vector<1x64xf32>
    %137 = vector.broadcast %136 : vector<1x64xf32> to vector<8x64xf32>
    %138 = arith.addf %135, %137 : vector<8x64xf32>
    %cst_73 = arith.constant 5.000000e-01 : f32
    %139 = vector.broadcast %cst_73 : f32 to vector<8x64xf32>
    %140 = arith.mulf %139, %138 : vector<8x64xf32>
    %cst_74 = arith.constant 0.707106769 : f32
    %141 = vector.broadcast %cst_74 : f32 to vector<8x64xf32>
    %142 = arith.mulf %138, %141 : vector<8x64xf32>
    %143 = math.erf %142 : vector<8x64xf32>
    %cst_75 = arith.constant 1.000000e+00 : f32
    %144 = vector.broadcast %cst_75 : f32 to vector<8x64xf32>
    %145 = arith.addf %144, %143 : vector<8x64xf32>
    %146 = arith.mulf %140, %145 : vector<8x64xf32>
    %147 = arith.truncf %146 : vector<8x64xf32> to vector<8x64xbf16>
    %c0_76 = arith.constant 0 : index
    %c0_77 = arith.constant 0 : index
    %148 = vector.load %arg16[%c0_76, %c0_77] : memref<64x32xbf16, #tpu.memory_space<vmem>>, vector<64x32xbf16>
    %cst_78 = arith.constant dense<0.000000e+00> : vector<8x32xf32>
    %149 = tpu.matmul %147, %148, %cst_78 {dimension_numbers = #tpu.dot_dimension_numbers<[1], [0], [0], [1], [0, 0, 1, 1], [], []>} : vector<8x64xbf16>, vector<64x32xbf16>, vector<8x32xf32> -> vector<8x32xf32>
    %c0_79 = arith.constant 0 : index
    %c0_80 = arith.constant 0 : index
    %150 = vector.load %arg17[%c0_79, %c0_80] : memref<1x32xf32, #tpu.memory_space<vmem>>, vector<1x32xf32>
    %151 = vector.broadcast %150 : vector<1x32xf32> to vector<8x32xf32>
    %152 = arith.addf %149, %151 : vector<8x32xf32>
    %153 = arith.addf %108, %152 : vector<8x32xf32>
    %c0_81 = arith.constant 0 : index
    %c0_82 = arith.constant 0 : index
    %c0_83 = arith.constant 0 : index
    %154 = vector.load %arg18[%c0_81, %c0_82, %c0_83] : memref<1x8x32xf32, #tpu.memory_space<vmem>>, vector<1x8x32xf32>
    %155 = vector.shape_cast %154 : vector<1x8x32xf32> to vector<8x32xf32>
    %156 = vector.shape_cast %153 : vector<8x32xf32> to vector<1x8x32xf32>
    tpu.vector_store %arg18[%c0_81, %c0_82, %c0_83], %156 {strides = array<i32>} : memref<1x8x32xf32, #tpu.memory_space<vmem>>, vector<1x8x32xf32>,
    return
  }
  func.func @transform_0(%arg0: i32, %arg1: i32) -> (i32, i32, i32) {
    %c0_i32 = arith.constant 0 : i32
    %c0_i32_0 = arith.constant 0 : i32
    %c0_i32_1 = arith.constant 0 : i32
    return %arg0, %c0_i32, %c0_i32_0 : i32, i32, i32
  }
  func.func @transform_1(%arg0: i32, %arg1: i32) -> (i32, i32, i32) {
    %c0_i32 = arith.constant 0 : i32
    %c0_i32_0 = arith.constant 0 : i32
    %c0_i32_1 = arith.constant 0 : i32
    return %arg0, %c0_i32, %c0_i32_0 : i32, i32, i32
  }
  func.func @transform_2(%arg0: i32, %arg1: i32) -> (i32, i32) {
    %c0_i32 = arith.constant 0 : i32
    %c0_i32_0 = arith.constant 0 : i32
    %c0_i32_1 = arith.constant 0 : i32
    return %c0_i32, %c0_i32_0 : i32, i32
  }
  func.func @transform_3(%arg0: i32, %arg1: i32) -> (i32, i32) {
    %c0_i32 = arith.constant 0 : i32
    %c0_i32_0 = arith.constant 0 : i32
    %c0_i32_1 = arith.constant 0 : i32
    return %c0_i32, %c0_i32_0 : i32, i32
  }
  func.func @transform_4(%arg0: i32, %arg1: i32) -> (i32, i32) {
    %c0_i32 = arith.constant 0 : i32
    %c0_i32_0 = arith.constant 0 : i32
    %c0_i32_1 = arith.constant 0 : i32
    return %c0_i32, %c0_i32_0 : i32, i32
  }
  func.func @transform_5(%arg0: i32, %arg1: i32) -> (i32, i32) {
    %c0_i32 = arith.constant 0 : i32
    %c0_i32_0 = arith.constant 0 : i32
    %c0_i32_1 = arith.constant 0 : i32
    return %c0_i32, %c0_i32_0 : i32, i32
  }
  func.func @transform_6(%arg0: i32, %arg1: i32) -> (i32, i32) {
    %c0_i32 = arith.constant 0 : i32
    %c0_i32_0 = arith.constant 0 : i32
    %c0_i32_1 = arith.constant 0 : i32
    return %c0_i32, %c0_i32_0 : i32, i32
  }
  func.func @transform_7(%arg0: i32, %arg1: i32) -> (i32, i32) {
    %c0_i32 = arith.constant 0 : i32
    %c0_i32_0 = arith.constant 0 : i32
    %c0_i32_1 = arith.constant 0 : i32
    return %c0_i32, %c0_i32_0 : i32, i32
  }
  func.func @transform_8(%arg0: i32, %arg1: i32) -> (i32, i32, i32) {
    %c0_i32 = arith.constant 0 : i32
    %c0_i32_0 = arith.constant 0 : i32
    %c0_i32_1 = arith.constant 0 : i32
    %c0_i32_2 = arith.constant 0 : i32
    return %c0_i32, %c0_i32_0, %c0_i32_1 : i32, i32, i32
  }
  func.func @transform_9(%arg0: i32, %arg1: i32) -> (i32, i32) {
    %c0_i32 = arith.constant 0 : i32
    %c0_i32_0 = arith.constant 0 : i32
    %c0_i32_1 = arith.constant 0 : i32
    return %c0_i32, %c0_i32_0 : i32, i32
  }
  func.func @transform_10(%arg0: i32, %arg1: i32) -> (i32, i32) {
    %c0_i32 = arith.constant 0 : i32
    %c0_i32_0 = arith.constant 0 : i32
    %c0_i32_1 = arith.constant 0 : i32
    return %c0_i32, %c0_i32_0 : i32, i32
  }
  func.func @transform_11(%arg0: i32, %arg1: i32) -> (i32, i32) {
    %c0_i32 = arith.constant 0 : i32
    %c0_i32_0 = arith.constant 0 : i32
    %c0_i32_1 = arith.constant 0 : i32
    return %c0_i32, %c0_i32_0 : i32, i32
  }
  func.func @transform_12(%arg0: i32, %arg1: i32) -> (i32, i32) {
    %c0_i32 = arith.constant 0 : i32
    %c0_i32_0 = arith.constant 0 : i32
    %c0_i32_1 = arith.constant 0 : i32
    return %c0_i32, %c0_i32_0 : i32, i32
  }
  func.func @transform_13(%arg0: i32, %arg1: i32) -> (i32, i32) {
    %c0_i32 = arith.constant 0 : i32
    %c0_i32_0 = arith.constant 0 : i32
    %c0_i32_1 = arith.constant 0 : i32
    return %c0_i32, %c0_i32_0 : i32, i32
  }
  func.func @transform_14(%arg0: i32, %arg1: i32) -> (i32, i32) {
    %c0_i32 = arith.constant 0 : i32
    %c0_i32_0 = arith.constant 0 : i32
    %c0_i32_1 = arith.constant 0 : i32
    return %c0_i32, %c0_i32_0 : i32, i32
  }
  func.func @transform_15(%arg0: i32, %arg1: i32) -> (i32, i32) {
    %c0_i32 = arith.constant 0 : i32
    %c0_i32_0 = arith.constant 0 : i32
    %c0_i32_1 = arith.constant 0 : i32
    return %c0_i32, %c0_i32_0 : i32, i32
  }
  func.func @transform_16(%arg0: i32, %arg1: i32) -> (i32, i32, i32) {
    %c0_i32 = arith.constant 0 : i32
    %c0_i32_0 = arith.constant 0 : i32
    return %arg0, %arg1, %c0_i32 : i32, i32, i32
  }
}

</mosaic_0001>

<llo_original>
// kernel: tpu_custom_call.1
$region0: #{tpu_custom_call.1}
  #allocation0 [shape = 'u32[]', space=smem, size = 0x4, offset = 0x4, fixed_abs, tag = 'smem constant byte address 0x4 - core index']
  #allocation1 [shape = 'u32[144,128]{1,0:T(1,128)}', space=vmem, size = 0x12000, scoped, tag = 'internal scratch']
  #allocation2 [shape = 'bf16[4,8,8]{2,1,0:T(8,128)(2,1)}', space=vmem, size = 0x2000, scoped, tag = 'scratch operand']
  #allocation3 [shape = 'bf16[4,16,8]{2,1,0:T(16,128)(2,1)}', space=vmem, size = 0x4000, scoped, tag = 'scratch operand']
  #allocation4 [shape = 'bf16[4,16,8]{2,1,0:T(16,128)(2,1)}', space=vmem, size = 0x4000, scoped, tag = 'scratch operand']
  %s0 = inlined_call_operand.vmem [shape: f32[2,16,32], index: 0, kind: input, shape index: {}]
  %s1 = inlined_call_operand.vmem [shape: f32[2,1,16], index: 1, kind: input, shape index: {}]
  %s2 = inlined_call_operand.hbm [shape: f32[1,32], index: 2, kind: input, shape index: {}]
  %s3 = inlined_call_operand.hbm [shape: f32[1,32], index: 3, kind: input, shape index: {}]
  %s4 = inlined_call_operand.vmem [shape: bf16[32,32], index: 4, kind: input, shape index: {}]
  %s5 = inlined_call_operand.hbm [shape: f32[1,32], index: 5, kind: input, shape index: {}]
  %s6 = inlined_call_operand.hbm [shape: bf16[32,64], index: 6, kind: input, shape index: {}]
  %s7 = inlined_call_operand.hbm [shape: f32[1,64], index: 7, kind: input, shape index: {}]
  %s8 = inlined_call_operand.hbm [shape: bf16[4,8,32], index: 8, kind: input, shape index: {}]
  %s9 = inlined_call_operand.hbm [shape: f32[1,32], index: 9, kind: input, shape index: {}]
  %s10 = inlined_call_operand.vmem [shape: f32[1,32], index: 10, kind: input, shape index: {}]
  %s11 = inlined_call_operand.vmem [shape: f32[1,32], index: 11, kind: input, shape index: {}]
  %s12 = inlined_call_operand.vmem [shape: bf16[32,64], index: 12, kind: input, shape index: {}]
  %s13 = inlined_call_operand.vmem [shape: f32[1,64], index: 13, kind: input, shape index: {}]
  %s14 = inlined_call_operand.vmem [shape: bf16[64,32], index: 14, kind: input, shape index: {}]
  %s15 = inlined_call_operand.vmem [shape: f32[1,32], index: 15, kind: input, shape index: {}]
  %s16 = inlined_call_operand.hbm [shape: f32[2,16,32], index: 16, kind: output, shape index: {}]
  %s17 = sld [smem:[#allocation0]]
  $region129: #{tpu_custom_call.1} parent=0
    _
  %s19 = ssub.s32 1, %s17
  %s20 = scalar_select 0, %s19, %s17
  $region1: #{tpu_custom_call.1} parent=0
    #allocation5 [shape = 'u8[512]{0}', space=vmem, size = 0x400, scoped, tag = 'input window, operand 2, single buffered']
    #allocation6 [shape = 's32[2]{0}', space=sflag, size = 0x8, scoped, tag = 'scoped memory for tpu_custom_call.1']
    #allocation7 [shape = 's32[2]{0}', space=sflag, size = 0x8, scoped, tag = 'scoped memory for tpu_custom_call.1']
    #allocation8 [shape = 'u8[512]{0}', space=vmem, size = 0x400, scoped, tag = 'input window, operand 3, single buffered']
    #allocation9 [shape = 's32[1]{0}', space=sflag, size = 0x4, scoped, tag = 'scoped memory for tpu_custom_call.1']
    #allocation10 [shape = 'u8[512]{0}', space=vmem, size = 0x400, scoped, tag = 'input window, operand 5, single buffered']
    #allocation11 [shape = 'u8[8192]{0}', space=vmem, size = 0x2000, scoped, tag = 'input window, operand 6, single buffered']
    #allocation12 [shape = 's32[1]{0}', space=sflag, size = 0x4, scoped, tag = 'scoped memory for tpu_custom_call.1']
    #allocation13 [shape = 'u8[512]{0}', space=vmem, size = 0x400, scoped, tag = 'input window, operand 7, single buffered']
    #allocation14 [shape = 'u8[8192]{0}', space=vmem, size = 0x2000, scoped, tag = 'input window, operand 8, single buffered']
    #allocation15 [shape = 's32[1]{0}', space=sflag, size = 0x4, scoped, tag = 'scoped memory for tpu_custom_call.1']
    #allocation16 [shape = 'u8[512]{0}', space=vmem, size = 0x400, scoped, tag = 'input window, operand 9, single buffered']
    #allocation17 [shape = 'u8[8192]{0}', space=vmem, size = 0x2000, scoped, tag = 'output window, operand 0']
    %21 = vsyncpa [#allocation6], 0
    %22 = vsyncpa [#allocation9], 0
    %23 = vsyncpa [#allocation12], 0
    %24 = vsyncpa [#allocation15], 0
    %25 = vsyncpa [#allocation7], 0
    %s26 = scalar_lea.sflag [#allocation7], 1
    %27 = vsyncpa %s26, 0
    loop: start=0, step=1, limit=6
    $region2: #{tpu_custom_call.1} parent=1 // loop_pre_header
      _
    $region3: #{tpu_custom_call.1} parent=1 // loop_header
      %s29 = sphi 0, %s33
      %p30 = scmp.ge.s32.totalorder %s29, 6
      %s36 = sphi 0, %s48
      %s37 = sphi 0, %s44
      %s38 = sphi 0, %s36
      %s39 = sphi 0, %s37
      %s40 = sphi 0, %s38
      %s41 = sphi 0, %s39
      %s51 = sphi 0, %s53
      %s54 = sphi 0, %s51
      %s55 = sphi 0, %s54
      %s71 = sphi 0, %s55
      %s77 = sphi 0, %s79
      %s80 = sphi 0, %s77
      %s81 = sphi 0, %s80
      %s97 = sphi 0, %s81
      %s101 = sphi 0, %s101
      %s103 = sphi 0, %s101
      %s104 = sphi 0, %s103
      %s118 = sphi 0, %s104
      %s122 = sphi 0, %s122
      %s124 = sphi 0, %s122
      %s125 = sphi 0, %s124
      %s139 = sphi 0, %s125
      %s143 = sphi 0, %s143
      %s145 = sphi 0, %s143
      %s146 = sphi 0, %s145
      %s160 = sphi 0, %s146
      %s164 = sphi 0, %s164
      %s166 = sphi 0, %s164
      %s167 = sphi 0, %s166
      %s181 = sphi 0, %s167
      %s185 = sphi 0, %s185
      %s187 = sphi 0, %s185
      %s188 = sphi 0, %s187
      %s202 = sphi 0, %s188
      %s206 = sphi 0, %s206
      %s208 = sphi 0, %s206
      %s209 = sphi 0, %s208
      %s223 = sphi 0, %s209
      %s227 = sphi 0, %s227
      %s229 = sphi 0, %s227
      %s230 = sphi 0, %s229
      %s244 = sphi 0, %s230
      %s248 = sphi 0, %s248
      %s250 = sphi 0, %s248
      %s251 = sphi 0, %s250
      %s265 = sphi 0, %s251
      %s269 = sphi 0, %s269
      %s271 = sphi 0, %s269
      %s272 = sphi 0, %s271
      %s286 = sphi 0, %s272
      %s290 = sphi 0, %s290
      %s292 = sphi 0, %s290
      %s293 = sphi 0, %s292
      %s307 = sphi 0, %s293
      %s311 = sphi 0, %s311
      %s313 = sphi 0, %s311
      %s314 = sphi 0, %s313
      %s328 = sphi 0, %s314
      %s332 = sphi 0, %s332
      %s334 = sphi 0, %s332
      %s335 = sphi 0, %s334
      %s349 = sphi 0, %s335
      %s353 = sphi 0, %s353
      %s355 = sphi 0, %s353
      %s356 = sphi 0, %s355
      %s370 = sphi 0, %s356
      %s374 = sphi 0, %s374
      %s376 = sphi 0, %s374
      %s377 = sphi 0, %s376
      %s391 = sphi 0, %s377
      %s399 = sphi 0, %s401
      %s402 = sphi 0, %s399
      %s403 = sphi 0, %s402
      %s419 = sphi 0, %s403
    $region4: #{tpu_custom_call.1} parent=1 // loop_header_branch
      %32 = sbr.rel (%p30) target = $region8
    $region5: #{tpu_custom_call.1} parent=1 // loop_body
      %s34 = ssub.s32 %s29, 1
      %s35 = ssub.s32 %s29, 2
      %s42 = sadd.s32 1, %s37
      %p43 = scmp.ge.s32.totalorder %s42, 2
      %s44 = scalar_select %p43, 0, %s42
      %s45 = sadd.s32 1, %s36
      %s46 = scalar_select %p43, %s45, %s36
      %p47 = scmp.ge.s32.totalorder %s46, 2
      %s48 = scalar_select %p47, 0, %s46
      %s49 = ssub.s32 %s36, %s48
      %p50 = scmp.eq.s32.totalorder %s49, 0
      %s52 = sadd.s32 %s51, 1
      %s53 = scalar_select %p50, %s51, %s52
      %p56 = pneg %p50
      %p57 = scmp.eq.s32.totalorder %s29, 3
      %p58 = por %p56, %p57
      %p59 = scmp.ne.s32.totalorder %s51, %s54
      %p60 = scmp.eq.s32.totalorder %s29, 0
      %p61 = por %p59, %p60
      %p62 = scmp.ne.s32.totalorder %s51, %s54
      %p63 = scmp.eq.s32.totalorder %s34, 3
      %p64 = por %p62, %p63
      %p65 = scmp.ne.s32.totalorder %s54, %s55
      %p66 = scmp.eq.s32.totalorder %s34, 0
      %p67 = por %p65, %p66
      %p68 = scmp.ne.s32.totalorder %s54, %s55
      %p69 = scmp.eq.s32.totalorder %s35, 3
      %p70 = por %p68, %p69
      %p72 = scmp.ne.s32.totalorder %s55, %s71
      %p73 = scmp.eq.s32.totalorder %s35, 0
      %p74 = por %p72, %p73
      %s75 = ssub.s32 %s36, %s48
      %p76 = scmp.eq.s32.totalorder %s75, 0
      %s78 = sadd.s32 %s77, 1
      %s79 = scalar_select %p76, %s77, %s78
      %p82 = pneg %p76
      %p83 = scmp.eq.s32.totalorder %s29, 3
      %p84 = por %p82, %p83
      %p85 = scmp.ne.s32.totalorder %s77, %s80
      %p86 = scmp.eq.s32.totalorder %s29, 0
      %p87 = por %p85, %p86
      %p88 = scmp.ne.s32.totalorder %s77, %s80
      %p89 = scmp.eq.s32.totalorder %s34, 3
      %p90 = por %p88, %p89
      %p91 = scmp.ne.s32.totalorder %s80, %s81
      %p92 = scmp.eq.s32.totalorder %s34, 0
      %p93 = por %p91, %p92
      %p94 = scmp.ne.s32.totalorder %s80, %s81
      %p95 = scmp.eq.s32.totalorder %s35, 3
      %p96 = por %p94, %p95
      %p98 = scmp.ne.s32.totalorder %s81, %s97
      %p99 = scmp.eq.s32.totalorder %s35, 0
      %p100 = por %p98, %p99
      %s102 = sadd.s32 %s101, 1
      %p105 = scmp.eq.s32.totalorder %s29, 3
      %p106 = scmp.ne.s32.totalorder %s101, %s103
      %p107 = scmp.eq.s32.totalorder %s29, 0
      %p108 = por %p106, %p107
      %p109 = scmp.ne.s32.totalorder %s101, %s103
      %p110 = scmp.eq.s32.totalorder %s34, 3
      %p111 = por %p109, %p110
      %p112 = scmp.ne.s32.totalorder %s103, %s104
      %p113 = scmp.eq.s32.totalorder %s34, 0
      %p114 = por %p112, %p113
      %p115 = scmp.ne.s32.totalorder %s103, %s104
      %p116 = scmp.eq.s32.totalorder %s35, 3
      %p117 = por %p115, %p116
      %p119 = scmp.ne.s32.totalorder %s104, %s118
      %p120 = scmp.eq.s32.totalorder %s35, 0
      %p121 = por %p119, %p120
      %s123 = sadd.s32 %s122, 1
      %p126 = scmp.eq.s32.totalorder %s29, 3
      %p127 = scmp.ne.s32.totalorder %s122, %s124
      %p128 = scmp.eq.s32.totalorder %s29, 0
      %p129 = por %p127, %p128
      %p130 = scmp.ne.s32.totalorder %s122, %s124
      %p131 = scmp.eq.s32.totalorder %s34, 3
      %p132 = por %p130, %p131
      %p133 = scmp.ne.s32.totalorder %s124, %s125
      %p134 = scmp.eq.s32.totalorder %s34, 0
      %p135 = por %p133, %p134
      %p136 = scmp.ne.s32.totalorder %s124, %s125
      %p137 = scmp.eq.s32.totalorder %s35, 3
      %p138 = por %p136, %p137
      %p140 = scmp.ne.s32.totalorder %s125, %s139
      %p141 = scmp.eq.s32.totalorder %s35, 0
      %p142 = por %p140, %p141
      %s144 = sadd.s32 %s143, 1
      %p147 = scmp.eq.s32.totalorder %s29, 3
      %p148 = scmp.ne.s32.totalorder %s143, %s145
      %p149 = scmp.eq.s32.totalorder %s29, 0
      %p150 = por %p148, %p149
      %p151 = scmp.ne.s32.totalorder %s143, %s145
      %p152 = scmp.eq.s32.totalorder %s34, 3
      %p153 = por %p151, %p152
      %p154 = scmp.ne.s32.totalorder %s145, %s146
      %p155 = scmp.eq.s32.totalorder %s34, 0
      %p156 = por %p154, %p155
      %p157 = scmp.ne.s32.totalorder %s145, %s146
      %p158 = scmp.eq.s32.totalorder %s35, 3
      %p159 = por %p157, %p158
      %p161 = scmp.ne.s32.totalorder %s146, %s160
      %p162 = scmp.eq.s32.totalorder %s35, 0
      %p163 = por %p161, %p162
      %s165 = sadd.s32 %s164, 1
      %p168 = scmp.eq.s32.totalorder %s29, 3
      %p169 = scmp.ne.s32.totalorder %s164, %s166
      %p170 = scmp.eq.s32.totalorder %s29, 0
      %p171 = por %p169, %p170
      %p172 = scmp.ne.s32.totalorder %s164, %s166
      %p173 = scmp.eq.s32.totalorder %s34, 3
      %p174 = por %p172, %p173
      %p175 = scmp.ne.s32.totalorder %s166, %s167
      %p176 = scmp.eq.s32.totalorder %s34, 0
      %p177 = por %p175, %p176
      %p178 = scmp.ne.s32.totalorder %s166, %s167
      %p179 = scmp.eq.s32.totalorder %s35, 3
      %p180 = por %p178, %p179
      %p182 = scmp.ne.s32.totalorder %s167, %s181
      %p183 = scmp.eq.s32.totalorder %s35, 0
      %p184 = por %p182, %p183
      %s186 = sadd.s32 %s185, 1
      %p189 = scmp.eq.s32.totalorder %s29, 3
      %p190 = scmp.ne.s32.totalorder %s185, %s187
      %p191 = scmp.eq.s32.totalorder %s29, 0
      %p192 = por %p190, %p191
      %p193 = scmp.ne.s32.totalorder %s185, %s187
      %p194 = scmp.eq.s32.totalorder %s34, 3
      %p195 = por %p193, %p194
      %p196 = scmp.ne.s32.totalorder %s187, %s188
      %p197 = scmp.eq.s32.totalorder %s34, 0
      %p198 = por %p196, %p197
      %p199 = scmp.ne.s32.totalorder %s187, %s188
      %p200 = scmp.eq.s32.totalorder %s35, 3
      %p201 = por %p199, %p200
      %p203 = scmp.ne.s32.totalorder %s188, %s202
      %p204 = scmp.eq.s32.totalorder %s35, 0
      %p205 = por %p203, %p204
      %s207 = sadd.s32 %s206, 1
      %p210 = scmp.eq.s32.totalorder %s29, 3
      %p211 = scmp.ne.s32.totalorder %s206, %s208
      %p212 = scmp.eq.s32.totalorder %s29, 0
      %p213 = por %p211, %p212
      %p214 = scmp.ne.s32.totalorder %s206, %s208
      %p215 = scmp.eq.s32.totalorder %s34, 3
      %p216 = por %p214, %p215
      %p217 = scmp.ne.s32.totalorder %s208, %s209
      %p218 = scmp.eq.s32.totalorder %s34, 0
      %p219 = por %p217, %p218
      %p220 = scmp.ne.s32.totalorder %s208, %s209
      %p221 = scmp.eq.s32.totalorder %s35, 3
      %p222 = por %p220, %p221
      %p224 = scmp.ne.s32.totalorder %s209, %s223
      %p225 = scmp.eq.s32.totalorder %s35, 0
      %p226 = por %p224, %p225
      %s228 = sadd.s32 %s227, 1
      %p231 = scmp.eq.s32.totalorder %s29, 3
      %p232 = scmp.ne.s32.totalorder %s227, %s229
      %p233 = scmp.eq.s32.totalorder %s29, 0
      %p234 = por %p232, %p233
      %p235 = scmp.ne.s32.totalorder %s227, %s229
      %p236 = scmp.eq.s32.totalorder %s34, 3
      %p237 = por %p235, %p236
      %p238 = scmp.ne.s32.totalorder %s229, %s230
      %p239 = scmp.eq.s32.totalorder %s34, 0
      %p240 = por %p238, %p239
      %p241 = scmp.ne.s32.totalorder %s229, %s230
      %p242 = scmp.eq.s32.totalorder %s35, 3
      %p243 = por %p241, %p242
      %p245 = scmp.ne.s32.totalorder %s230, %s244
      %p246 = scmp.eq.s32.totalorder %s35, 0
      %p247 = por %p245, %p246
      %s249 = sadd.s32 %s248, 1
      %p252 = scmp.eq.s32.totalorder %s29, 3
      %p253 = scmp.ne.s32.totalorder %s248, %s250
      %p254 = scmp.eq.s32.totalorder %s29, 0
      %p255 = por %p253, %p254
      %p256 = scmp.ne.s32.totalorder %s248, %s250
      %p257 = scmp.eq.s32.totalorder %s34, 3
      %p258 = por %p256, %p257
      %p259 = scmp.ne.s32.totalorder %s250, %s251
      %p260 = scmp.eq.s32.totalorder %s34, 0
      %p261 = por %p259, %p260
      %p262 = scmp.ne.s32.totalorder %s250, %s251
      %p263 = scmp.eq.s32.totalorder %s35, 3
      %p264 = por %p262, %p263
      %p266 = scmp.ne.s32.totalorder %s251, %s265
      %p267 = scmp.eq.s32.totalorder %s35, 0
      %p268 = por %p266, %p267
      %s270 = sadd.s32 %s269, 1
      %p273 = scmp.eq.s32.totalorder %s29, 3
      %p274 = scmp.ne.s32.totalorder %s269, %s271
      %p275 = scmp.eq.s32.totalorder %s29, 0
      %p276 = por %p274, %p275
      %p277 = scmp.ne.s32.totalorder %s269, %s271
      %p278 = scmp.eq.s32.totalorder %s34, 3
      %p279 = por %p277, %p278
      %p280 = scmp.ne.s32.totalorder %s271, %s272
      %p281 = scmp.eq.s32.totalorder %s34, 0
      %p282 = por %p280, %p281
      %p283 = scmp.ne.s32.totalorder %s271, %s272
      %p284 = scmp.eq.s32.totalorder %s35, 3
      %p285 = por %p283, %p284
      %p287 = scmp.ne.s32.totalorder %s272, %s286
      %p288 = scmp.eq.s32.totalorder %s35, 0
      %p289 = por %p287, %p288
      %s291 = sadd.s32 %s290, 1
      %p294 = scmp.eq.s32.totalorder %s29, 3
      %p295 = scmp.ne.s32.totalorder %s290, %s292
      %p296 = scmp.eq.s32.totalorder %s29, 0
      %p297 = por %p295, %p296
      %p298 = scmp.ne.s32.totalorder %s290, %s292
      %p299 = scmp.eq.s32.totalorder %s34, 3
      %p300 = por %p298, %p299
      %p301 = scmp.ne.s32.totalorder %s292, %s293
      %p302 = scmp.eq.s32.totalorder %s34, 0
      %p303 = por %p301, %p302
      %p304 = scmp.ne.s32.totalorder %s292, %s293
      %p305 = scmp.eq.s32.totalorder %s35, 3
      %p306 = por %p304, %p305
      %p308 = scmp.ne.s32.totalorder %s293, %s307
      %p309 = scmp.eq.s32.totalorder %s35, 0
      %p310 = por %p308, %p309
      %s312 = sadd.s32 %s311, 1
      %p315 = scmp.eq.s32.totalorder %s29, 3
      %p316 = scmp.ne.s32.totalorder %s311, %s313
      %p317 = scmp.eq.s32.totalorder %s29, 0
      %p318 = por %p316, %p317
      %p319 = scmp.ne.s32.totalorder %s311, %s313
      %p320 = scmp.eq.s32.totalorder %s34, 3
      %p321 = por %p319, %p320
      %p322 = scmp.ne.s32.totalorder %s313, %s314
      %p323 = scmp.eq.s32.totalorder %s34, 0
      %p324 = por %p322, %p323
      %p325 = scmp.ne.s32.totalorder %s313, %s314
      %p326 = scmp.eq.s32.totalorder %s35, 3
      %p327 = por %p325, %p326
      %p329 = scmp.ne.s32.totalorder %s314, %s328
      %p330 = scmp.eq.s32.totalorder %s35, 0
      %p331 = por %p329, %p330
      %s333 = sadd.s32 %s332, 1
      %p336 = scmp.eq.s32.totalorder %s29, 3
      %p337 = scmp.ne.s32.totalorder %s332, %s334
      %p338 = scmp.eq.s32.totalorder %s29, 0
      %p339 = por %p337, %p338
      %p340 = scmp.ne.s32.totalorder %s332, %s334
      %p341 = scmp.eq.s32.totalorder %s34, 3
      %p342 = por %p340, %p341
      %p343 = scmp.ne.s32.totalorder %s334, %s335
      %p344 = scmp.eq.s32.totalorder %s34, 0
      %p345 = por %p343, %p344
      %p346 = scmp.ne.s32.totalorder %s334, %s335
      %p347 = scmp.eq.s32.totalorder %s35, 3
      %p348 = por %p346, %p347
      %p350 = scmp.ne.s32.totalorder %s335, %s349
      %p351 = scmp.eq.s32.totalorder %s35, 0
      %p352 = por %p350, %p351
      %s354 = sadd.s32 %s353, 1
      %p357 = scmp.eq.s32.totalorder %s29, 3
      %p358 = scmp.ne.s32.totalorder %s353, %s355
      %p359 = scmp.eq.s32.totalorder %s29, 0
      %p360 = por %p358, %p359
      %p361 = scmp.ne.s32.totalorder %s353, %s355
      %p362 = scmp.eq.s32.totalorder %s34, 3
      %p363 = por %p361, %p362
      %p364 = scmp.ne.s32.totalorder %s355, %s356
      %p365 = scmp.eq.s32.totalorder %s34, 0
      %p366 = por %p364, %p365
      %p367 = scmp.ne.s32.totalorder %s355, %s356
      %p368 = scmp.eq.s32.totalorder %s35, 3
      %p369 = por %p367, %p368
      %p371 = scmp.ne.s32.totalorder %s356, %s370
      %p372 = scmp.eq.s32.totalorder %s35, 0
      %p373 = por %p371, %p372
      %s375 = sadd.s32 %s374, 1
      %p378 = scmp.eq.s32.totalorder %s29, 3
      %p379 = scmp.ne.s32.totalorder %s374, %s376
      %p380 = scmp.eq.s32.totalorder %s29, 0
      %p381 = por %p379, %p380
      %p382 = scmp.ne.s32.totalorder %s374, %s376
      %p383 = scmp.eq.s32.totalorder %s34, 3
      %p384 = por %p382, %p383
      %p385 = scmp.ne.s32.totalorder %s376, %s377
      %p386 = scmp.eq.s32.totalorder %s34, 0
      %p387 = por %p385, %p386
      %p388 = scmp.ne.s32.totalorder %s376, %s377
      %p389 = scmp.eq.s32.totalorder %s35, 3
      %p390 = por %p388, %p389
      %p392 = scmp.ne.s32.totalorder %s377, %s391
      %p393 = scmp.eq.s32.totalorder %s35, 0
      %p394 = por %p392, %p393
      %s395 = ssub.s32 %s36, %s48
      %s396 = ssub.s32 %s37, %s44
      %s397 = sor.u32 %s395, %s396
      %p398 = scmp.eq.s32.totalorder %s397, 0
      %s400 = sadd.s32 %s399, 1
      %s401 = scalar_select %p398, %s399, %s400
      %p404 = pneg %p398
      %p405 = scmp.eq.s32.totalorder %s29, 3
      %p406 = por %p404, %p405
      %p407 = scmp.ne.s32.totalorder %s399, %s402
      %p408 = scmp.eq.s32.totalorder %s29, 0
      %p409 = por %p407, %p408
      %p410 = scmp.ne.s32.totalorder %s399, %s402
      %p411 = scmp.eq.s32.totalorder %s34, 3
      %p412 = por %p410, %p411
      %p413 = scmp.ne.s32.totalorder %s402, %s403
      %p414 = scmp.eq.s32.totalorder %s34, 0
      %p415 = por %p413, %p414
      %p416 = scmp.ne.s32.totalorder %s402, %s403
      %p417 = scmp.eq.s32.totalorder %s35, 3
      %p418 = por %p416, %p417
      %p420 = scmp.ne.s32.totalorder %s403, %s419
      %p421 = scmp.eq.s32.totalorder %s35, 0
      %p422 = por %p420, %p421
      %p423 = scmp.le.s32.totalorder 1, %s29
      %p424 = scmp.lt.s32.totalorder %s29, 5
      %p425 = pnand %p423, %p424
      %p426 = pneg %p425
      // Predicated region
      $region9: #{tpu_custom_call.1} parent=5 // pred_check
        _
      $region10: #{tpu_custom_call.1} parent=5 // pred_check_branch
        %428 = sbr.rel (%p425) target = $region12
      $region11: #{tpu_custom_call.1} parent=5 // pred_region
        %s429 = ssub.s32 %s29, 1
        // Predicated region
        $region13: #{tpu_custom_call.1} parent=11 // pred_check
          %p430 = pneg %p114
        $region14: #{tpu_custom_call.1} parent=11 // pred_check_branch
          %432 = sbr.rel (%p430) target = $region16
        $region15: #{tpu_custom_call.1} parent=11 // pred_region
          %s434 = ssub.s32 16, 16
          %435 = vsyncadd [#allocation6], %s434
          %s437 = sshll.u32 [#allocation5], 4
          %s438 = int_to_ptr.vmem [resolvable:$true] %s437
          %440 = dma.hbm_to_vmem [thread:$0]  %s2, 16, %s438, [#allocation6]
        $region16: #{tpu_custom_call.1} parent=11 // pred_fallthru
          _
        // Predicated region
        $region17: #{tpu_custom_call.1} parent=11 // pred_check
          %p441 = pneg %p135
        $region18: #{tpu_custom_call.1} parent=11 // pred_check_branch
          %443 = sbr.rel (%p441) target = $region20
        $region19: #{tpu_custom_call.1} parent=11 // pred_region
          %s445 = ssub.s32 16, 16
          %446 = vsyncadd [#allocation9], %s445
          %s448 = sshll.u32 [#allocation8], 4
          %s449 = int_to_ptr.vmem [resolvable:$true] %s448
          %451 = dma.hbm_to_vmem [thread:$0]  %s3, 16, %s449, [#allocation9]
        $region20: #{tpu_custom_call.1} parent=11 // pred_fallthru
          _
        // Predicated region
        $region21: #{tpu_custom_call.1} parent=11 // pred_check
          %p452 = pneg %p156
        $region22: #{tpu_custom_call.1} parent=11 // pred_check_branch
          %454 = sbr.rel (%p452) target = $region24
        $region23: #{tpu_custom_call.1} parent=11 // pred_region
          _
        $region24: #{tpu_custom_call.1} parent=11 // pred_fallthru
          _
        // Predicated region
        $region25: #{tpu_custom_call.1} parent=11 // pred_check
          %p455 = pneg %p177
        $region26: #{tpu_custom_call.1} parent=11 // pred_check_branch
          %457 = sbr.rel (%p455) target = $region28
        $region27: #{tpu_custom_call.1} parent=11 // pred_region
          %s459 = ssub.s32 16, 16
          %460 = vsyncadd [#allocation9], %s459
          %s462 = sshll.u32 [#allocation10], 4
          %s463 = int_to_ptr.vmem [resolvable:$true] %s462
          %465 = dma.hbm_to_vmem [thread:$0]  %s5, 16, %s463, [#allocation9]
        $region28: #{tpu_custom_call.1} parent=11 // pred_fallthru
          _
        // Predicated region
        $region29: #{tpu_custom_call.1} parent=11 // pred_check
          %p466 = pneg %p198
        $region30: #{tpu_custom_call.1} parent=11 // pred_check_branch
          %468 = sbr.rel (%p466) target = $region32
        $region31: #{tpu_custom_call.1} parent=11 // pred_region
          %s470 = ssub.s32 256, 256
          %471 = vsyncadd [#allocation12], %s470
          %s472 = sshll.u32 [#allocation11], 4
          %s473 = int_to_ptr.vmem [resolvable:$true] %s472
          %478 = dma.hbm_to_vmem [thread:$0]  %s6, 256, %s473, [#allocation12], 64, 64, 4
        $region32: #{tpu_custom_call.1} parent=11 // pred_fallthru
          _
        // Predicated region
        $region33: #{tpu_custom_call.1} parent=11 // pred_check
          %p479 = pneg %p219
        $region34: #{tpu_custom_call.1} parent=11 // pred_check_branch
          %481 = sbr.rel (%p479) target = $region36
        $region35: #{tpu_custom_call.1} parent=11 // pred_region
          %s483 = ssub.s32 16, 16
          %484 = vsyncadd [#allocation12], %s483
          %s486 = sshll.u32 [#allocation13], 4
          %s487 = int_to_ptr.vmem [resolvable:$true] %s486
          %489 = dma.hbm_to_vmem [thread:$0]  %s7, 16, %s487, [#allocation12]
        $region36: #{tpu_custom_call.1} parent=11 // pred_fallthru
          _
        // Predicated region
        $region37: #{tpu_custom_call.1} parent=11 // pred_check
          %p490 = pneg %p240
        $region38: #{tpu_custom_call.1} parent=11 // pred_check_branch
          %492 = sbr.rel (%p490) target = $region40
        $region39: #{tpu_custom_call.1} parent=11 // pred_region
          %s494 = ssub.s32 256, 256
          %495 = vsyncadd [#allocation15], %s494
          %s496 = sshll.u32 [#allocation14], 4
          %s497 = int_to_ptr.vmem [resolvable:$true] %s496
          %502 = dma.hbm_to_vmem [thread:$0]  %s8, 256, %s497, [#allocation15], 64, 64, 4
        $region40: #{tpu_custom_call.1} parent=11 // pred_fallthru
          _
        // Predicated region
        $region41: #{tpu_custom_call.1} parent=11 // pred_check
          %p503 = pneg %p261
        $region42: #{tpu_custom_call.1} parent=11 // pred_check_branch
          %505 = sbr.rel (%p503) target = $region44
        $region43: #{tpu_custom_call.1} parent=11 // pred_region
          %s507 = ssub.s32 16, 16
          %508 = vsyncadd [#allocation15], %s507
          %s510 = sshll.u32 [#allocation16], 4
          %s511 = int_to_ptr.vmem [resolvable:$true] %s510
          %513 = dma.hbm_to_vmem [thread:$0]  %s9, 16, %s511, [#allocation15]
        $region44: #{tpu_custom_call.1} parent=11 // pred_fallthru
          _
        // Predicated region
        $region45: #{tpu_custom_call.1} parent=11 // pred_check
          %p514 = pneg %p282
        $region46: #{tpu_custom_call.1} parent=11 // pred_check_branch
          %516 = sbr.rel (%p514) target = $region48
        $region47: #{tpu_custom_call.1} parent=11 // pred_region
          _
        $region48: #{tpu_custom_call.1} parent=11 // pred_fallthru
          _
        // Predicated region
        $region49: #{tpu_custom_call.1} parent=11 // pred_check
          %p517 = pneg %p303
        $region50: #{tpu_custom_call.1} parent=11 // pred_check_branch
          %519 = sbr.rel (%p517) target = $region52
        $region51: #{tpu_custom_call.1} parent=11 // pred_region
          _
        $region52: #{tpu_custom_call.1} parent=11 // pred_fallthru
          _
        // Predicated region
        $region53: #{tpu_custom_call.1} parent=11 // pred_check
          %p520 = pneg %p324
        $region54: #{tpu_custom_call.1} parent=11 // pred_check_branch
          %522 = sbr.rel (%p520) target = $region56
        $region55: #{tpu_custom_call.1} parent=11 // pred_region
          _
        $region56: #{tpu_custom_call.1} parent=11 // pred_fallthru
          _
        // Predicated region
        $region57: #{tpu_custom_call.1} parent=11 // pred_check
          %p523 = pneg %p345
        $region58: #{tpu_custom_call.1} parent=11 // pred_check_branch
          %525 = sbr.rel (%p523) target = $region60
        $region59: #{tpu_custom_call.1} parent=11 // pred_region
          _
        $region60: #{tpu_custom_call.1} parent=11 // pred_fallthru
          _
        // Predicated region
        $region61: #{tpu_custom_call.1} parent=11 // pred_check
          %p526 = pneg %p366
        $region62: #{tpu_custom_call.1} parent=11 // pred_check_branch
          %528 = sbr.rel (%p526) target = $region64
        $region63: #{tpu_custom_call.1} parent=11 // pred_region
          _
        $region64: #{tpu_custom_call.1} parent=11 // pred_fallthru
          _
        // Predicated region
        $region65: #{tpu_custom_call.1} parent=11 // pred_check
          %p529 = pneg %p387
        $region66: #{tpu_custom_call.1} parent=11 // pred_check_branch
          %531 = sbr.rel (%p529) target = $region68
        $region67: #{tpu_custom_call.1} parent=11 // pred_region
          _
        $region68: #{tpu_custom_call.1} parent=11 // pred_fallthru
          _
      $region12: #{tpu_custom_call.1} parent=5 // pred_fallthru
        _
      %p532 = scmp.lt.s32.totalorder %s29, 4
      // Predicated region
      $region69: #{tpu_custom_call.1} parent=5 // pred_check
        %p533 = pneg %p532
      $region70: #{tpu_custom_call.1} parent=5 // pred_check_branch
        %535 = sbr.rel (%p533) target = $region72
      $region71: #{tpu_custom_call.1} parent=5 // pred_region
        // Predicated region
        $region73: #{tpu_custom_call.1} parent=71 // pred_check
          %p536 = pneg %p61
        $region74: #{tpu_custom_call.1} parent=71 // pred_check_branch
          %538 = sbr.rel (%p536) target = $region76
        $region75: #{tpu_custom_call.1} parent=71 // pred_region
          %p539 = scmp.lt.s32.totalorder %s36, 1
          %s540 = scalar_select %p539, %s36, 1
          %s541 = smul.addr %s540, 2
          %s542 = smul.addr %s541, 8
          %s543 = scalar_lea.vmem %s0, %s542
        $region76: #{tpu_custom_call.1} parent=71 // pred_fallthru
          _
        // Predicated region
        $region77: #{tpu_custom_call.1} parent=71 // pred_check
          %p544 = pneg %p87
        $region78: #{tpu_custom_call.1} parent=71 // pred_check_branch
          %546 = sbr.rel (%p544) target = $region80
        $region79: #{tpu_custom_call.1} parent=71 // pred_region
          %p547 = scmp.lt.s32.totalorder %s36, 1
          %s548 = scalar_select %p547, %s36, 1
          %s549 = scalar_lea.vmem %s1, %s548
        $region80: #{tpu_custom_call.1} parent=71 // pred_fallthru
          _
      $region72: #{tpu_custom_call.1} parent=5 // pred_fallthru
        _
      %p550 = scmp.le.s32.totalorder 1, %s29
      %p551 = scmp.lt.s32.totalorder %s29, 5
      %p552 = pnand %p550, %p551
      %p553 = pneg %p552
      // Predicated region
      $region81: #{tpu_custom_call.1} parent=5 // pred_check
        _
      $region82: #{tpu_custom_call.1} parent=5 // pred_check_branch
        %555 = sbr.rel (%p552) target = $region84
      $region83: #{tpu_custom_call.1} parent=5 // pred_region
        %s556 = ssub.s32 %s29, 1
        // Predicated region
        $region85: #{tpu_custom_call.1} parent=83 // pred_check
          %p557 = pneg %p114
        $region86: #{tpu_custom_call.1} parent=83 // pred_check_branch
          %559 = sbr.rel (%p557) target = $region88
        $region87: #{tpu_custom_call.1} parent=83 // pred_region
          %560 = dma.done [#allocation6], 16
        $region88: #{tpu_custom_call.1} parent=83 // pred_fallthru
          _
        // Predicated region
        $region89: #{tpu_custom_call.1} parent=83 // pred_check
          %p561 = pneg %p135
        $region90: #{tpu_custom_call.1} parent=83 // pred_check_branch
          %563 = sbr.rel (%p561) target = $region92
        $region91: #{tpu_custom_call.1} parent=83 // pred_region
          %564 = dma.done [#allocation9], 16
        $region92: #{tpu_custom_call.1} parent=83 // pred_fallthru
          _
        // Predicated region
        $region93: #{tpu_custom_call.1} parent=83 // pred_check
          %p565 = pneg %p177
        $region94: #{tpu_custom_call.1} parent=83 // pred_check_branch
          %567 = sbr.rel (%p565) target = $region96
        $region95: #{tpu_custom_call.1} parent=83 // pred_region
          %568 = dma.done [#allocation9], 16
        $region96: #{tpu_custom_call.1} parent=83 // pred_fallthru
          _
        // Predicated region
        $region97: #{tpu_custom_call.1} parent=83 // pred_check
          %p569 = pneg %p198
        $region98: #{tpu_custom_call.1} parent=83 // pred_check_branch
          %571 = sbr.rel (%p569) target = $region100
        $region99: #{tpu_custom_call.1} parent=83 // pred_region
          %572 = dma.done [#allocation12], 256
        $region100: #{tpu_custom_call.1} parent=83 // pred_fallthru
          _
        // Predicated region
        $region101: #{tpu_custom_call.1} parent=83 // pred_check
          %p573 = pneg %p219
        $region102: #{tpu_custom_call.1} parent=83 // pred_check_branch
          %575 = sbr.rel (%p573) target = $region104
        $region103: #{tpu_custom_call.1} parent=83 // pred_region
          %576 = dma.done [#allocation12], 16
        $region104: #{tpu_custom_call.1} parent=83 // pred_fallthru
          _
        // Predicated region
        $region105: #{tpu_custom_call.1} parent=83 // pred_check
          %p577 = pneg %p240
        $region106: #{tpu_custom_call.1} parent=83 // pred_check_branch
          %579 = sbr.rel (%p577) target = $region108
        $region107: #{tpu_custom_call.1} parent=83 // pred_region
          %580 = dma.done [#allocation15], 256
        $region108: #{tpu_custom_call.1} parent=83 // pred_fallthru
          _
        // Predicated region
        $region109: #{tpu_custom_call.1} parent=83 // pred_check
          %p581 = pneg %p261
        $region110: #{tpu_custom_call.1} parent=83 // pred_check_branch
          %583 = sbr.rel (%p581) target = $region112
        $region111: #{tpu_custom_call.1} parent=83 // pred_region
          %584 = dma.done [#allocation15], 16
        $region112: #{tpu_custom_call.1} parent=83 // pred_fallthru
          _
        %p585 = scmp.lt.s32.totalorder %s38, 1
        %s586 = scalar_select %p585, %s38, 1
        %s587 = smul.addr %s586, 2
        %s588 = smul.addr %s587, 8
        %s589 = scalar_lea.vmem %s0, %s588
        %p590 = pneg %p67
        %p591 = pneg %p64
        %p592 = scmp.lt.s32.totalorder %s38, 1
        %s593 = scalar_select %p592, %s38, 1
        %s594 = scalar_lea.vmem %s1, %s593
        %p595 = pneg %p93
        %p596 = pneg %p90
        %p597 = pneg %p114
        %p598 = pneg %p111
        %p599 = pneg %p135
        %p600 = pneg %p132
        %p601 = pneg %p156
        %p602 = pneg %p153
        %p603 = pneg %p177
        %p604 = pneg %p174
        %p605 = pneg %p198
        %p606 = pneg %p195
        %p607 = pneg %p219
        %p608 = pneg %p216
        %p609 = pneg %p240
        %p610 = pneg %p237
        %p611 = pneg %p261
        %p612 = pneg %p258
        %p613 = pneg %p282
        %p614 = pneg %p279
        %p615 = pneg %p303
        %p616 = pneg %p300
        %p617 = pneg %p324
        %p618 = pneg %p321
        %p619 = pneg %p345
        %p620 = pneg %p342
        %p621 = pneg %p366
        %p622 = pneg %p363
        %p623 = pneg %p387
        %p624 = pneg %p384
        %p625 = pneg %p415
        %p626 = pneg %p412
        %s627 = sand.u32 %s402, 1
        %s628 = scalar_lea.sflag [#allocation7], %s627
        %s629 = sand.u32 %s402, 1
        %s630 = smul.addr %s629, 8
        %s631 = scalar_lea.vmem [#allocation17], %s630
        %p632 = scmp.lt.s32.totalorder %s38, 1
        %s633 = scalar_select %p632, %s38, 1
        %s634 = smul.addr %s633, 2
        %s635 = smul.addr %s634, 8
        %s636 = scalar_lea.vmem %s0, %s635
        %p637 = scmp.lt.s32.totalorder %s38, 1
        %s638 = scalar_select %p637, %s38, 1
        %s639 = scalar_lea.vmem %s1, %s638
        %p641 = scmp.eq.s32.totalorder %s39, 0
        // Predicated region
        $region113: #{tpu_custom_call.1} parent=83 // pred_check
          %p642 = pneg %p641
        $region114: #{tpu_custom_call.1} parent=83 // pred_check_branch
          %644 = sbr.rel (%p642) target = $region116
        $region115: #{tpu_custom_call.1} parent=83 // pred_region
          %v645 = vld [vmem:[%s636] sm:$0xff]
          %v646 = vld [vmem:[%s636 + $0x8] sm:$0xff]
          %v647 = vld [vmem:[#allocation5] sm:$0x1]
          %v648 = vld [vmem:[#allocation8] sm:$0x1]
          %vm649 = vcmask 261120
          %v650 = vsel %vm649, %v645, 0.0
          %651 = vadd.xlane.f32.xlu0 %v650
          %v652 = vpop.xlane.xlu0 %651
          %v653 = vsel %vm649, %v646, 0.0
          %654 = vadd.xlane.f32.xlu0 %v653
          %v655 = vpop.xlane.xlu0 %654
          %v656 = vrcp.pop 32.0
          %v657 = vmul.f32 %v652, %v656
          %v658 = vmul.f32 %v655, %v656
          %v659 = vsub.f32 %v645, %v657
          %v660 = vsub.f32 %v646, %v658
          %v661 = vmul.f32 %v659, %v659
          %v662 = vmul.f32 %v660, %v660
          %v663 = vsel %vm649, %v661, 0.0
          %664 = vadd.xlane.f32.xlu0 %v663
          %v665 = vpop.xlane.xlu0 %664
          %v666 = vsel %vm649, %v662, 0.0
          %667 = vadd.xlane.f32.xlu0 %v666
          %v668 = vpop.xlane.xlu0 %667
          %v669 = vmul.f32 %v665, %v656
          %v670 = vmul.f32 %v668, %v656
          %v671 = vadd.f32 %v669, 1e-05
          %v672 = vadd.f32 %v670, 1e-05
          %v673 = vrsqrt.pop %v671
          %v674 = vrsqrt.pop %v672
          %v675 = vmul.f32 %v659, %v673
          %v676 = vmul.f32 %v660, %v674
          %v678 = vlaneseq
          %v679 = vshrl.u32 %v678, 7
          %v680 = vsub.s32 0, %v679
          %v681 = vrot.slane %v647, %v680
          %v683 = vmul.f32 %v675, %v681
          %v684 = vmul.f32 %v676, %v681
          %v686 = vlaneseq
          %v687 = vshrl.u32 %v686, 7
          %v688 = vsub.s32 0, %v687
          %v689 = vrot.slane %v648, %v688
          %v691 = vadd.f32 %v683, %v689
          %v692 = vadd.f32 %v684, %v689
          %v693 = vpack.c.bf16 %v692, %v691
          %v694 = vld [vmem:[#allocation11] sm:$0xf]
          %v695 = vld [vmem:[#allocation11 + $0x4] sm:$0xf]
          %v696 = vld [vmem:[#allocation11 + $0x8] sm:$0xf]
          %v697 = vld [vmem:[#allocation11 + $0xc] sm:$0xf]
          %v698 = vld [vmem:[#allocation13] sm:$0x1]
          %v700 = vlaneseq
          %v701 = vshrl.u32 %v700, 7
          %v702 = vsub.s32 0, %v701
          %v703 = vrot.slane %v698, %v702
          %v709 = vunpack.c.l.b16 %v694
          %v710 = vunpack.c.l.b16 %v695
          %v711 = vunpack.c.l.b16 %v696
          %v712 = vunpack.c.l.b16 %v697
          %v713 = vpack.c.b16 %v710, %v709
          %v714 = vpack.c.b16 %v712, %v711
          %v718 = vsel %vm649, %v693, 0
          %720 = vmatprep.subr.bf16.mxu0 0
          %721 = vmatpush1.bf16.msra.mxu0 %v713
          %722 = vmatprep.subr.bf16.mxu0 0
          %723 = vmatpush1.bf16.msra.mxu0 %v714
          %724 = vmatprep.subr.bf16.mxu0 0
          %725 = vmatpush1.bf16.msra.mxu0 0
          %726 = vmatprep.subr.bf16.mxu0 0
          %727 = vmatpush1.bf16.msra.mxu0 0
          %728 = vmatprep.subr.bf16.mxu0 0
          %729 = vmatpush1.bf16.msra.mxu0 0
          %730 = vmatprep.subr.bf16.mxu0 0
          %731 = vmatpush1.bf16.msra.mxu0 0
          %732 = vmatprep.subr.bf16.mxu0 0
          %733 = vmatpush1.bf16.msra.mxu0 0
          %734 = vmatprep.subr.bf16.mxu0 0
          %735 = vmatpush1.bf16.msra.mxu0 0
          %736 = vmatprep.subr.bf16.mxu0 0
          %737 = vmatpush1.bf16.msra.mxu0 0
          %738 = vmatprep.subr.bf16.mxu0 0
          %739 = vmatpush1.bf16.msra.mxu0 0
          %740 = vmatprep.subr.bf16.mxu0 0
          %741 = vmatpush1.bf16.msra.mxu0 0
          %742 = vmatprep.subr.bf16.mxu0 0
          %743 = vmatpush1.bf16.msra.mxu0 0
          %744 = vmatprep.subr.bf16.mxu0 0
          %745 = vmatpush1.bf16.msra.mxu0 0
          %746 = vmatprep.subr.bf16.mxu0 0
          %747 = vmatpush1.bf16.msra.mxu0 0
          %748 = vmatprep.subr.bf16.mxu0 0
          %749 = vmatpush1.bf16.msra.mxu0 0
          %750 = vmatprep.subr.bf16.mxu0 0
          %751 = vmatpush1.bf16.msra.mxu0 0
          %752 = vmatprep.mubr.bf16.mxu0 0
          %753 = vmatmul.mubr.bf16.gmra.mrb[0].mxu0 %v718
          %v754 = vpop.f32.mrb[0].mxu0
          %v755 = vadd.f32 %v703, %v754
          %v756 = vpop.f32.mrb[0].mxu0
          %v757 = vpop.f32.mrb[0].mxu0
          %v758 = vadd.f32 %v703, %v757
          %v759 = vpop.f32.mrb[0].mxu0
          %760 = vdwg.mxu0
          %v761 = vpack.c.bf16 %v758, %v755
          %vm762 = vcmask 64512
          %763 = vst.msk [vmem:[#allocation3] sm:$0xff] %vm762, %v761
          %765 = vrot.lane.b32.xlu0 %v761, 96
          %v766 = vpop.permute.xlu0 %765
          %768 = vst.msk [vmem:[#allocation4] sm:$0xff] %vm762, %v766
          %769 = vrot.lane.b32.xlu0 %v761, 120
          %v770 = vpop.permute.xlu0 %769
          %s772 = scalar_lea.vmem [#allocation3], 8
          %773 = vst.msk [vmem:[%s772] sm:$0xff] %vm762, %v770
          %774 = vrot.lane.b32.xlu0 %v761, 88
          %v775 = vpop.permute.xlu0 %774
          %s777 = scalar_lea.vmem [#allocation4], 8
          %778 = vst.msk [vmem:[%s777] sm:$0xff] %vm762, %v775
          %779 = vrot.lane.b32.xlu0 %v761, 112
          %v780 = vpop.permute.xlu0 %779
          %s782 = scalar_lea.vmem [#allocation3], 16
          %783 = vst.msk [vmem:[%s782] sm:$0xff] %vm762, %v780
          %784 = vrot.lane.b32.xlu0 %v761, 80
          %v785 = vpop.permute.xlu0 %784
          %s787 = scalar_lea.vmem [#allocation4], 16
          %788 = vst.msk [vmem:[%s787] sm:$0xff] %vm762, %v785
          %789 = vrot.lane.b32.xlu0 %v761, 104
          %v790 = vpop.permute.xlu0 %789
          %s792 = scalar_lea.vmem [#allocation3], 24
          %793 = vst.msk [vmem:[%s792] sm:$0xff] %vm762, %v790
          %794 = vrot.lane.b32.xlu0 %v761, 72
          %v795 = vpop.permute.xlu0 %794
          %s797 = scalar_lea.vmem [#allocation4], 24
          %798 = vst.msk [vmem:[%s797] sm:$0xff] %vm762, %v795
        $region116: #{tpu_custom_call.1} parent=83 // pred_fallthru
          _
        %s799 = smul.u32 %s39, 8
        %s800 = scalar_lea.vmem %s636, %s799
        %v801 = vld [vmem:[%s800] sm:$0xff]
        %v802 = vld [vmem:[#allocation5] sm:$0x1]
        %v803 = vld [vmem:[#allocation8] sm:$0x1]
        %vm804 = vcmask 261120
        %v805 = vsel %vm804, %v801, 0.0
        %806 = vadd.xlane.f32.xlu0 %v805
        %v807 = vpop.xlane.xlu0 %806
        %v808 = vrcp.pop 32.0
        %v809 = vmul.f32 %v807, %v808
        %v810 = vsub.f32 %v801, %v809
        %v811 = vmul.f32 %v810, %v810
        %v812 = vsel %vm804, %v811, 0.0
        %813 = vadd.xlane.f32.xlu0 %v812
        %v814 = vpop.xlane.xlu0 %813
        %v815 = vmul.f32 %v814, %v808
        %v816 = vadd.f32 %v815, 1e-05
        %v817 = vrsqrt.pop %v816
        %v818 = vmul.f32 %v810, %v817
        %v820 = vlaneseq
        %v821 = vshrl.u32 %v820, 7
        %v822 = vsub.s32 0, %v821
        %v823 = vrot.slane %v802, %v822
        %v825 = vmul.f32 %v818, %v823
        %v827 = vlaneseq
        %v828 = vshrl.u32 %v827, 7
        %v829 = vsub.s32 0, %v828
        %v830 = vrot.slane %v803, %v829
        %v832 = vadd.f32 %v825, %v830
        %v833 = vpack.c.bf16 %v832, %v832
        %v834 = vld [vmem:[%s4] sm:$0xf]
        %v835 = vld [vmem:[%s4 + $0x4] sm:$0xf]
        %v836 = vld [vmem:[%s4 + $0x8] sm:$0xf]
        %v837 = vld [vmem:[%s4 + $0xc] sm:$0xf]
        %v838 = vld [vmem:[#allocation10] sm:$0x1]
        %v840 = vlaneseq
        %v841 = vshrl.u32 %v840, 7
        %v842 = vsub.s32 0, %v841
        %v843 = vrot.slane %v838, %v842
        %v849 = vunpack.c.l.b16 %v834
        %v850 = vunpack.c.l.b16 %v835
        %v851 = vunpack.c.l.b16 %v836
        %v852 = vunpack.c.l.b16 %v837
        %v853 = vpack.c.b16 %v850, %v849
        %v854 = vpack.c.b16 %v852, %v851
        %v858 = vsel %vm804, %v833, 0
        %860 = vmatprep.subr.bf16.mxu0 0
        %861 = vmatpush1.bf16.msra.mxu0 %v853
        %862 = vmatprep.subr.bf16.mxu0 0
        %863 = vmatpush1.bf16.msra.mxu0 %v854
        %864 = vmatprep.subr.bf16.mxu0 0
        %865 = vmatpush1.bf16.msra.mxu0 0
        %866 = vmatprep.subr.bf16.mxu0 0
        %867 = vmatpush1.bf16.msra.mxu0 0
        %868 = vmatprep.subr.bf16.mxu0 0
        %869 = vmatpush1.bf16.msra.mxu0 0
        %870 = vmatprep.subr.bf16.mxu0 0
        %871 = vmatpush1.bf16.msra.mxu0 0
        %872 = vmatprep.subr.bf16.mxu0 0
        %873 = vmatpush1.bf16.msra.mxu0 0
        %874 = vmatprep.subr.bf16.mxu0 0
        %875 = vmatpush1.bf16.msra.mxu0 0
        %876 = vmatprep.subr.bf16.mxu0 0
        %877 = vmatpush1.bf16.msra.mxu0 0
        %878 = vmatprep.subr.bf16.mxu0 0
        %879 = vmatpush1.bf16.msra.mxu0 0
        %880 = vmatprep.subr.bf16.mxu0 0
        %881 = vmatpush1.bf16.msra.mxu0 0
        %882 = vmatprep.subr.bf16.mxu0 0
        %883 = vmatpush1.bf16.msra.mxu0 0
        %884 = vmatprep.subr.bf16.mxu0 0
        %885 = vmatpush1.bf16.msra.mxu0 0
        %886 = vmatprep.subr.bf16.mxu0 0
        %887 = vmatpush1.bf16.msra.mxu0 0
        %888 = vmatprep.subr.bf16.mxu0 0
        %889 = vmatpush1.bf16.msra.mxu0 0
        %890 = vmatprep.subr.bf16.mxu0 0
        %891 = vmatpush1.bf16.msra.mxu0 0
        %892 = vmatprep.mubr.bf16.mxu0 0
        %893 = vmatmul.mubr.bf16.gmra.mrb[0].mxu0 %v858
        %v894 = vpop.f32.mrb[0].mxu0
        %v895 = vadd.f32 %v843, %v894
        %v896 = vpop.f32.mrb[0].mxu0
        %v897 = vpop.f32.mrb[0].mxu0
        %v898 = vpop.f32.mrb[0].mxu0
        %899 = vdwg.mxu0
        %v900 = vmul.f32 %v895, 0.35355338
        %v901 = vpack.c.bf16 %v900, %v900
        %vm902 = vcmask 60416
        %903 = vst.msk [vmem:[#allocation2] sm:$0xf] %vm902, %v901
        %v905 = vunpack.c.l.b16 %v901
        %v906 = vpack.c.b16 %v905, %v905
        %907 = vrot.lane.b32.xlu0 %v906, 120
        %v908 = vpop.permute.xlu0 %907
        %s910 = scalar_lea.vmem [#allocation2], 4
        %911 = vst.msk [vmem:[%s910] sm:$0xf] %vm902, %v908
        %912 = vrot.lane.b32.xlu0 %v906, 112
        %v913 = vpop.permute.xlu0 %912
        %s915 = scalar_lea.vmem [#allocation2], 8
        %916 = vst.msk [vmem:[%s915] sm:$0xf] %vm902, %v913
        %917 = vrot.lane.b32.xlu0 %v906, 104
        %v918 = vpop.permute.xlu0 %917
        %s920 = scalar_lea.vmem [#allocation2], 12
        %921 = vst.msk [vmem:[%s920] sm:$0xf] %vm902, %v918
        %v922 = vld [vmem:[#allocation2] sm:$0xf]
        %v923 = vld [vmem:[#allocation2 + $0x4] sm:$0xf]
        %v924 = vld [vmem:[#allocation2 + $0x8] sm:$0xf]
        %v925 = vld [vmem:[#allocation2 + $0xc] sm:$0xf]
        %v926 = vld [vmem:[#allocation3] sm:$0xff]
        %v927 = vld [vmem:[#allocation3 + $0x8] sm:$0xff]
        %v928 = vld [vmem:[#allocation3 + $0x10] sm:$0xff]
        %v929 = vld [vmem:[#allocation3 + $0x18] sm:$0xff]
        %v930 = vld [vmem:[%s639] sm:$0x1]
        %v932 = vlaneseq
        %v933 = vshrl.u32 %v932, 7
        %v934 = vsub.s32 0, %v933
        %v935 = vrot.slane %v930, %v934
        %vm937 = vcmask 64512
        %v939 = vsel %vm937, %v922, 0
        %v942 = vsel %vm937, %v926, 0
        %944 = vmatprep.subr.bf16.mxu0 0
        %945 = vmatpush1.bf16.xpose.msra.mxu0 %v942
        %946 = vmatprep.subr.bf16.mxu0 0
        %947 = vmatpush1.bf16.xpose.msra.mxu0 0
        %948 = vmatprep.subr.bf16.mxu0 0
        %949 = vmatpush1.bf16.xpose.msra.mxu0 0
        %950 = vmatprep.subr.bf16.mxu0 0
        %951 = vmatpush1.bf16.xpose.msra.mxu0 0
        %952 = vmatprep.subr.bf16.mxu0 0
        %953 = vmatpush1.bf16.xpose.msra.mxu0 0
        %954 = vmatprep.subr.bf16.mxu0 0
        %955 = vmatpush1.bf16.xpose.msra.mxu0 0
        %956 = vmatprep.subr.bf16.mxu0 0
        %957 = vmatpush1.bf16.xpose.msra.mxu0 0
        %958 = vmatprep.subr.bf16.mxu0 0
        %959 = vmatpush1.bf16.xpose.msra.mxu0 0
        %960 = vmatprep.subr.bf16.mxu0 0
        %961 = vmatpush1.bf16.xpose.msra.mxu0 0
        %962 = vmatprep.subr.bf16.mxu0 0
        %963 = vmatpush1.bf16.xpose.msra.mxu0 0
        %964 = vmatprep.subr.bf16.mxu0 0
        %965 = vmatpush1.bf16.xpose.msra.mxu0 0
        %966 = vmatprep.subr.bf16.mxu0 0
        %967 = vmatpush1.bf16.xpose.msra.mxu0 0
        %968 = vmatprep.subr.bf16.mxu0 0
        %969 = vmatpush1.bf16.xpose.msra.mxu0 0
        %970 = vmatprep.subr.bf16.mxu0 0
        %971 = vmatpush1.bf16.xpose.msra.mxu0 0
        %972 = vmatprep.subr.bf16.mxu0 0
        %973 = vmatpush1.bf16.xpose.msra.mxu0 0
        %974 = vmatprep.subr.bf16.mxu0 0
        %975 = vmatpush1.bf16.xpose.msra.mxu0 0
        %976 = vmatprep.mubr.bf16.mxu0 0
        %977 = vmatmul.mubr.bf16.gmra.mrb[0].mxu0 %v939
        %v978 = vpop.f32.mrb[0].mxu0
        %v979 = vadd.f32 %v935, %v978
        %v980 = vpop.f32.mrb[0].mxu0
        %v981 = vpop.f32.mrb[0].mxu0
        %v982 = vpop.f32.mrb[0].mxu0
        %983 = vdwg.mxu0
        %v985 = vsel %vm937, %v923, 0
        %v988 = vsel %vm937, %v927, 0
        %990 = vmatprep.subr.bf16.mxu0 0
        %991 = vmatpush1.bf16.xpose.msra.mxu0 %v988
        %992 = vmatprep.subr.bf16.mxu0 0
        %993 = vmatpush1.bf16.xpose.msra.mxu0 0
        %994 = vmatprep.subr.bf16.mxu0 0
        %995 = vmatpush1.bf16.xpose.msra.mxu0 0
        %996 = vmatprep.subr.bf16.mxu0 0
        %997 = vmatpush1.bf16.xpose.msra.mxu0 0
        %998 = vmatprep.subr.bf16.mxu0 0
        %999 = vmatpush1.bf16.xpose.msra.mxu0 0
        %1000 = vmatprep.subr.bf16.mxu0 0
        %1001 = vmatpush1.bf16.xpose.msra.mxu0 0
        %1002 = vmatprep.subr.bf16.mxu0 0
        %1003 = vmatpush1.bf16.xpose.msra.mxu0 0
        %1004 = vmatprep.subr.bf16.mxu0 0
        %1005 = vmatpush1.bf16.xpose.msra.mxu0 0
        %1006 = vmatprep.subr.bf16.mxu0 0
        %1007 = vmatpush1.bf16.xpose.msra.mxu0 0
        %1008 = vmatprep.subr.bf16.mxu0 0
        %1009 = vmatpush1.bf16.xpose.msra.mxu0 0
        %1010 = vmatprep.subr.bf16.mxu0 0
        %1011 = vmatpush1.bf16.xpose.msra.mxu0 0
        %1012 = vmatprep.subr.bf16.mxu0 0
        %1013 = vmatpush1.bf16.xpose.msra.mxu0 0
        %1014 = vmatprep.subr.bf16.mxu0 0
        %1015 = vmatpush1.bf16.xpose.msra.mxu0 0
        %1016 = vmatprep.subr.bf16.mxu0 0
        %1017 = vmatpush1.bf16.xpose.msra.mxu0 0
        %1018 = vmatprep.subr.bf16.mxu0 0
        %1019 = vmatpush1.bf16.xpose.msra.mxu0 0
        %1020 = vmatprep.subr.bf16.mxu0 0
        %1021 = vmatpush1.bf16.xpose.msra.mxu0 0
        %1022 = vmatprep.mubr.bf16.mxu0 0
        %1023 = vmatmul.mubr.bf16.gmra.mrb[0].mxu0 %v985
        %v1024 = vpop.f32.mrb[0].mxu0
        %v1025 = vadd.f32 %v935, %v1024
        %v1026 = vpop.f32.mrb[0].mxu0
        %v1027 = vpop.f32.mrb[0].mxu0
        %v1028 = vpop.f32.mrb[0].mxu0
        %1029 = vdwg.mxu0
        %v1031 = vsel %vm937, %v924, 0
        %v1034 = vsel %vm937, %v928, 0
        %1036 = vmatprep.subr.bf16.mxu0 0
        %1037 = vmatpush1.bf16.xpose.msra.mxu0 %v1034
        %1038 = vmatprep.subr.bf16.mxu0 0
        %1039 = vmatpush1.bf16.xpose.msra.mxu0 0
        %1040 = vmatprep.subr.bf16.mxu0 0
        %1041 = vmatpush1.bf16.xpose.msra.mxu0 0
        %1042 = vmatprep.subr.bf16.mxu0 0
        %1043 = vmatpush1.bf16.xpose.msra.mxu0 0
        %1044 = vmatprep.subr.bf16.mxu0 0
        %1045 = vmatpush1.bf16.xpose.msra.mxu0 0
        %1046 = vmatprep.subr.bf16.mxu0 0
        %1047 = vmatpush1.bf16.xpose.msra.mxu0 0
        %1048 = vmatprep.subr.bf16.mxu0 0
        %1049 = vmatpush1.bf16.xpose.msra.mxu0 0
        %1050 = vmatprep.subr.bf16.mxu0 0
        %1051 = vmatpush1.bf16.xpose.msra.mxu0 0
        %1052 = vmatprep.subr.bf16.mxu0 0
        %1053 = vmatpush1.bf16.xpose.msra.mxu0 0
        %1054 = vmatprep.subr.bf16.mxu0 0
        %1055 = vmatpush1.bf16.xpose.msra.mxu0 0
        %1056 = vmatprep.subr.bf16.mxu0 0
        %1057 = vmatpush1.bf16.xpose.msra.mxu0 0
        %1058 = vmatprep.subr.bf16.mxu0 0
        %1059 = vmatpush1.bf16.xpose.msra.mxu0 0
        %1060 = vmatprep.subr.bf16.mxu0 0
        %1061 = vmatpush1.bf16.xpose.msra.mxu0 0
        %1062 = vmatprep.subr.bf16.mxu0 0
        %1063 = vmatpush1.bf16.xpose.msra.mxu0 0
        %1064 = vmatprep.subr.bf16.mxu0 0
        %1065 = vmatpush1.bf16.xpose.msra.mxu0 0
        %1066 = vmatprep.subr.bf16.mxu0 0
        %1067 = vmatpush1.bf16.xpose.msra.mxu0 0
        %1068 = vmatprep.mubr.bf16.mxu0 0
        %1069 = vmatmul.mubr.bf16.gmra.mrb[0].mxu0 %v1031
        %v1070 = vpop.f32.mrb[0].mxu0
        %v1071 = vadd.f32 %v935, %v1070
        %v1072 = vpop.f32.mrb[0].mxu0
        %v1073 = vpop.f32.mrb[0].mxu0
        %v1074 = vpop.f32.mrb[0].mxu0
        %1075 = vdwg.mxu0
        %v1077 = vsel %vm937, %v925, 0
        %v1080 = vsel %vm937, %v929, 0
        %1082 = vmatprep.subr.bf16.mxu0 0
        %1083 = vmatpush1.bf16.xpose.msra.mxu0 %v1080
        %1084 = vmatprep.subr.bf16.mxu0 0
        %1085 = vmatpush1.bf16.xpose.msra.mxu0 0
        %1086 = vmatprep.subr.bf16.mxu0 0
        %1087 = vmatpush1.bf16.xpose.msra.mxu0 0
        %1088 = vmatprep.subr.bf16.mxu0 0
        %1089 = vmatpush1.bf16.xpose.msra.mxu0 0
        %1090 = vmatprep.subr.bf16.mxu0 0
        %1091 = vmatpush1.bf16.xpose.msra.mxu0 0
        %1092 = vmatprep.subr.bf16.mxu0 0
        %1093 = vmatpush1.bf16.xpose.msra.mxu0 0
        %1094 = vmatprep.subr.bf16.mxu0 0
        %1095 = vmatpush1.bf16.xpose.msra.mxu0 0
        %1096 = vmatprep.subr.bf16.mxu0 0
        %1097 = vmatpush1.bf16.xpose.msra.mxu0 0
        %1098 = vmatprep.subr.bf16.mxu0 0
        %1099 = vmatpush1.bf16.xpose.msra.mxu0 0
        %1100 = vmatprep.subr.bf16.mxu0 0
        %1101 = vmatpush1.bf16.xpose.msra.mxu0 0
        %1102 = vmatprep.subr.bf16.mxu0 0
        %1103 = vmatpush1.bf16.xpose.msra.mxu0 0
        %1104 = vmatprep.subr.bf16.mxu0 0
        %1105 = vmatpush1.bf16.xpose.msra.mxu0 0
        %1106 = vmatprep.subr.bf16.mxu0 0
        %1107 = vmatpush1.bf16.xpose.msra.mxu0 0
        %1108 = vmatprep.subr.bf16.mxu0 0
        %1109 = vmatpush1.bf16.xpose.msra.mxu0 0
        %1110 = vmatprep.subr.bf16.mxu0 0
        %1111 = vmatpush1.bf16.xpose.msra.mxu0 0
        %1112 = vmatprep.subr.bf16.mxu0 0
        %1113 = vmatpush1.bf16.xpose.msra.mxu0 0
        %1114 = vmatprep.mubr.bf16.mxu0 0
        %1115 = vmatmul.mubr.bf16.gmra.mrb[0].mxu0 %v1077
        %v1116 = vpop.f32.mrb[0].mxu0
        %v1117 = vadd.f32 %v935, %v1116
        %v1118 = vpop.f32.mrb[0].mxu0
        %v1119 = vpop.f32.mrb[0].mxu0
        %v1120 = vpop.f32.mrb[0].mxu0
        %1121 = vdwg.mxu0
        %vm1122 = vcmask 130048
        %v1123 = vsel %vm1122, %v979, -inf
        %1124 = vmax.xlane.f32.xlu0 %v1123
        %v1125 = vpop.xlane.xlu0 %1124
        %v1126 = vsel %vm1122, %v1025, -inf
        %1127 = vmax.xlane.f32.xlu0 %v1126
        %v1128 = vpop.xlane.xlu0 %1127
        %v1129 = vsel %vm1122, %v1071, -inf
        %1130 = vmax.xlane.f32.xlu0 %v1129
        %v1131 = vpop.xlane.xlu0 %1130
        %v1132 = vsel %vm1122, %v1117, -inf
        %1133 = vmax.xlane.f32.xlu0 %v1132
        %v1134 = vpop.xlane.xlu0 %1133
        %v1135 = vsub.f32 %v979, %v1125
        %v1136 = vsub.f32 %v1025, %v1128
        %v1137 = vsub.f32 %v1071, %v1131
        %v1138 = vsub.f32 %v1117, %v1134
        %v1139 = vmul.f32 %v1135, 1.442695
        %v1140 = vpow.pop %v1139
        %v1141 = vmul.f32 %v1136, 1.442695
        %v1142 = vpow.pop %v1141
        %v1143 = vmul.f32 %v1137, 1.442695
        %v1144 = vpow.pop %v1143
        %v1145 = vmul.f32 %v1138, 1.442695
        %v1146 = vpow.pop %v1145
        %v1147 = vsel %vm1122, %v1140, 0.0
        %1148 = vadd.xlane.f32.xlu0 %v1147
        %v1149 = vpop.xlane.xlu0 %1148
        %v1150 = vsel %vm1122, %v1142, 0.0
        %1151 = vadd.xlane.f32.xlu0 %v1150
        %v1152 = vpop.xlane.xlu0 %1151
        %v1153 = vsel %vm1122, %v1144, 0.0
        %1154 = vadd.xlane.f32.xlu0 %v1153
        %v1155 = vpop.xlane.xlu0 %1154
        %v1156 = vsel %vm1122, %v1146, 0.0
        %1157 = vadd.xlane.f32.xlu0 %v1156
        %v1158 = vpop.xlane.xlu0 %1157
        %v1159 = vpack.c.bf16 %v1140, %v1140
        %v1160 = vpack.c.bf16 %v1142, %v1142
        %v1161 = vpack.c.bf16 %v1144, %v1144
        %v1162 = vpack.c.bf16 %v1146, %v1146
        %v1163 = vld [vmem:[#allocation4] sm:$0xff]
        %v1164 = vld [vmem:[#allocation4 + $0x8] sm:$0xff]
        %v1165 = vld [vmem:[#allocation4 + $0x10] sm:$0xff]
        %v1166 = vld [vmem:[#allocation4 + $0x18] sm:$0xff]
        %v1168 = vsel %vm1122, %v1159, 0
        %1170 = vmatprep.subr.bf16.mxu0 0
        %1171 = vmatpush1.bf16.msra.mxu0 %v1163
        %1172 = vmatprep.subr.bf16.mxu0 0
        %1173 = vmatpush1.bf16.msra.mxu0 0
        %1174 = vmatprep.subr.bf16.mxu0 0
        %1175 = vmatpush1.bf16.msra.mxu0 0
        %1176 = vmatprep.subr.bf16.mxu0 0
        %1177 = vmatpush1.bf16.msra.mxu0 0
        %1178 = vmatprep.subr.bf16.mxu0 0
        %1179 = vmatpush1.bf16.msra.mxu0 0
        %1180 = vmatprep.subr.bf16.mxu0 0
        %1181 = vmatpush1.bf16.msra.mxu0 0
        %1182 = vmatprep.subr.bf16.mxu0 0
        %1183 = vmatpush1.bf16.msra.mxu0 0
        %1184 = vmatprep.subr.bf16.mxu0 0
        %1185 = vmatpush1.bf16.msra.mxu0 0
        %1186 = vmatprep.subr.bf16.mxu0 0
        %1187 = vmatpush1.bf16.msra.mxu0 0
        %1188 = vmatprep.subr.bf16.mxu0 0
        %1189 = vmatpush1.bf16.msra.mxu0 0
        %1190 = vmatprep.subr.bf16.mxu0 0
        %1191 = vmatpush1.bf16.msra.mxu0 0
        %1192 = vmatprep.subr.bf16.mxu0 0
        %1193 = vmatpush1.bf16.msra.mxu0 0
        %1194 = vmatprep.subr.bf16.mxu0 0
        %1195 = vmatpush1.bf16.msra.mxu0 0
        %1196 = vmatprep.subr.bf16.mxu0 0
        %1197 = vmatpush1.bf16.msra.mxu0 0
        %1198 = vmatprep.subr.bf16.mxu0 0
        %1199 = vmatpush1.bf16.msra.mxu0 0
        %1200 = vmatprep.subr.bf16.mxu0 0
        %1201 = vmatpush1.bf16.msra.mxu0 0
        %1202 = vmatprep.mubr.bf16.mxu0 0
        %1203 = vmatmul.mubr.bf16.gmra.mrb[0].mxu0 %v1168
        %v1204 = vpop.f32.mrb[0].mxu0
        %v1205 = vadd.f32 0.0, %v1204
        %v1206 = vpop.f32.mrb[0].mxu0
        %v1207 = vpop.f32.mrb[0].mxu0
        %v1208 = vpop.f32.mrb[0].mxu0
        %1209 = vdwg.mxu0
        %v1211 = vsel %vm1122, %v1160, 0
        %1213 = vmatprep.subr.bf16.mxu0 0
        %1214 = vmatpush1.bf16.msra.mxu0 %v1164
        %1215 = vmatprep.subr.bf16.mxu0 0
        %1216 = vmatpush1.bf16.msra.mxu0 0
        %1217 = vmatprep.subr.bf16.mxu0 0
        %1218 = vmatpush1.bf16.msra.mxu0 0
        %1219 = vmatprep.subr.bf16.mxu0 0
        %1220 = vmatpush1.bf16.msra.mxu0 0
        %1221 = vmatprep.subr.bf16.mxu0 0
        %1222 = vmatpush1.bf16.msra.mxu0 0
        %1223 = vmatprep.subr.bf16.mxu0 0
        %1224 = vmatpush1.bf16.msra.mxu0 0
        %1225 = vmatprep.subr.bf16.mxu0 0
        %1226 = vmatpush1.bf16.msra.mxu0 0
        %1227 = vmatprep.subr.bf16.mxu0 0
        %1228 = vmatpush1.bf16.msra.mxu0 0
        %1229 = vmatprep.subr.bf16.mxu0 0
        %1230 = vmatpush1.bf16.msra.mxu0 0
        %1231 = vmatprep.subr.bf16.mxu0 0
        %1232 = vmatpush1.bf16.msra.mxu0 0
        %1233 = vmatprep.subr.bf16.mxu0 0
        %1234 = vmatpush1.bf16.msra.mxu0 0
        %1235 = vmatprep.subr.bf16.mxu0 0
        %1236 = vmatpush1.bf16.msra.mxu0 0
        %1237 = vmatprep.subr.bf16.mxu0 0
        %1238 = vmatpush1.bf16.msra.mxu0 0
        %1239 = vmatprep.subr.bf16.mxu0 0
        %1240 = vmatpush1.bf16.msra.mxu0 0
        %1241 = vmatprep.subr.bf16.mxu0 0
        %1242 = vmatpush1.bf16.msra.mxu0 0
        %1243 = vmatprep.subr.bf16.mxu0 0
        %1244 = vmatpush1.bf16.msra.mxu0 0
        %1245 = vmatprep.mubr.bf16.mxu0 0
        %1246 = vmatmul.mubr.bf16.gmra.mrb[0].mxu0 %v1211
        %v1247 = vpop.f32.mrb[0].mxu0
        %v1248 = vadd.f32 0.0, %v1247
        %v1249 = vpop.f32.mrb[0].mxu0
        %v1250 = vpop.f32.mrb[0].mxu0
        %v1251 = vpop.f32.mrb[0].mxu0
        %1252 = vdwg.mxu0
        %v1254 = vsel %vm1122, %v1161, 0
        %1256 = vmatprep.subr.bf16.mxu0 0
        %1257 = vmatpush1.bf16.msra.mxu0 %v1165
        %1258 = vmatprep.subr.bf16.mxu0 0
        %1259 = vmatpush1.bf16.msra.mxu0 0
        %1260 = vmatprep.subr.bf16.mxu0 0
        %1261 = vmatpush1.bf16.msra.mxu0 0
        %1262 = vmatprep.subr.bf16.mxu0 0
        %1263 = vmatpush1.bf16.msra.mxu0 0
        %1264 = vmatprep.subr.bf16.mxu0 0
        %1265 = vmatpush1.bf16.msra.mxu0 0
        %1266 = vmatprep.subr.bf16.mxu0 0
        %1267 = vmatpush1.bf16.msra.mxu0 0
        %1268 = vmatprep.subr.bf16.mxu0 0
        %1269 = vmatpush1.bf16.msra.mxu0 0
        %1270 = vmatprep.subr.bf16.mxu0 0
        %1271 = vmatpush1.bf16.msra.mxu0 0
        %1272 = vmatprep.subr.bf16.mxu0 0
        %1273 = vmatpush1.bf16.msra.mxu0 0
        %1274 = vmatprep.subr.bf16.mxu0 0
        %1275 = vmatpush1.bf16.msra.mxu0 0
        %1276 = vmatprep.subr.bf16.mxu0 0
        %1277 = vmatpush1.bf16.msra.mxu0 0
        %1278 = vmatprep.subr.bf16.mxu0 0
        %1279 = vmatpush1.bf16.msra.mxu0 0
        %1280 = vmatprep.subr.bf16.mxu0 0
        %1281 = vmatpush1.bf16.msra.mxu0 0
        %1282 = vmatprep.subr.bf16.mxu0 0
        %1283 = vmatpush1.bf16.msra.mxu0 0
        %1284 = vmatprep.subr.bf16.mxu0 0
        %1285 = vmatpush1.bf16.msra.mxu0 0
        %1286 = vmatprep.subr.bf16.mxu0 0
        %1287 = vmatpush1.bf16.msra.mxu0 0
        %1288 = vmatprep.mubr.bf16.mxu0 0
        %1289 = vmatmul.mubr.bf16.gmra.mrb[0].mxu0 %v1254
        %v1290 = vpop.f32.mrb[0].mxu0
        %v1291 = vadd.f32 0.0, %v1290
        %v1292 = vpop.f32.mrb[0].mxu0
        %v1293 = vpop.f32.mrb[0].mxu0
        %v1294 = vpop.f32.mrb[0].mxu0
        %1295 = vdwg.mxu0
        %v1297 = vsel %vm1122, %v1162, 0
        %1299 = vmatprep.subr.bf16.mxu0 0
        %1300 = vmatpush1.bf16.msra.mxu0 %v1166
        %1301 = vmatprep.subr.bf16.mxu0 0
        %1302 = vmatpush1.bf16.msra.mxu0 0
        %1303 = vmatprep.subr.bf16.mxu0 0
        %1304 = vmatpush1.bf16.msra.mxu0 0
        %1305 = vmatprep.subr.bf16.mxu0 0
        %1306 = vmatpush1.bf16.msra.mxu0 0
        %1307 = vmatprep.subr.bf16.mxu0 0
        %1308 = vmatpush1.bf16.msra.mxu0 0
        %1309 = vmatprep.subr.bf16.mxu0 0
        %1310 = vmatpush1.bf16.msra.mxu0 0
        %1311 = vmatprep.subr.bf16.mxu0 0
        %1312 = vmatpush1.bf16.msra.mxu0 0
        %1313 = vmatprep.subr.bf16.mxu0 0
        %1314 = vmatpush1.bf16.msra.mxu0 0
        %1315 = vmatprep.subr.bf16.mxu0 0
        %1316 = vmatpush1.bf16.msra.mxu0 0
        %1317 = vmatprep.subr.bf16.mxu0 0
        %1318 = vmatpush1.bf16.msra.mxu0 0
        %1319 = vmatprep.subr.bf16.mxu0 0
        %1320 = vmatpush1.bf16.msra.mxu0 0
        %1321 = vmatprep.subr.bf16.mxu0 0
        %1322 = vmatpush1.bf16.msra.mxu0 0
        %1323 = vmatprep.subr.bf16.mxu0 0
        %1324 = vmatpush1.bf16.msra.mxu0 0
        %1325 = vmatprep.subr.bf16.mxu0 0
        %1326 = vmatpush1.bf16.msra.mxu0 0
        %1327 = vmatprep.subr.bf16.mxu0 0
        %1328 = vmatpush1.bf16.msra.mxu0 0
        %1329 = vmatprep.subr.bf16.mxu0 0
        %1330 = vmatpush1.bf16.msra.mxu0 0
        %1331 = vmatprep.mubr.bf16.mxu0 0
        %1332 = vmatmul.mubr.bf16.gmra.mrb[0].mxu0 %v1297
        %v1333 = vpop.f32.mrb[0].mxu0
        %v1334 = vadd.f32 0.0, %v1333
        %v1335 = vpop.f32.mrb[0].mxu0
        %v1336 = vpop.f32.mrb[0].mxu0
        %v1337 = vpop.f32.mrb[0].mxu0
        %1338 = vdwg.mxu0
        %v1339 = vrcp.pop %v1149
        %v1340 = vrcp.pop %v1152
        %v1341 = vrcp.pop %v1155
        %v1342 = vrcp.pop %v1158
        %v1343 = vmul.f32 %v1205, %v1339
        %v1344 = vmul.f32 %v1248, %v1340
        %v1345 = vmul.f32 %v1291, %v1341
        %v1346 = vmul.f32 %v1334, %v1342
        %v1347 = vpack.c.bf16 %v1343, %v1343
        %v1348 = vpack.c.bf16 %v1344, %v1344
        %v1349 = vpack.c.bf16 %v1345, %v1345
        %v1350 = vpack.c.bf16 %v1346, %v1346
        %v1351 = vld [vmem:[#allocation14] sm:$0xf]
        %s1352 = scalar_lea.vmem [#allocation14], 4
        %v1353 = vld [vmem:[%s1352] sm:$0xf]
        %v1355 = vsel %vm937, %v1348, 0
        %vm1357 = vcmask 1043456
        %v1359 = vsel %vm1357, %v1353, 0
        %1361 = vmatprep.subr.bf16.mxu0 0
        %1362 = vmatpush1.bf16.msra.mxu0 %v1359
        %1363 = vmatprep.subr.bf16.mxu0 0
        %1364 = vmatpush1.bf16.msra.mxu0 0
        %1365 = vmatprep.subr.bf16.mxu0 0
        %1366 = vmatpush1.bf16.msra.mxu0 0
        %1367 = vmatprep.subr.bf16.mxu0 0
        %1368 = vmatpush1.bf16.msra.mxu0 0
        %1369 = vmatprep.subr.bf16.mxu0 0
        %1370 = vmatpush1.bf16.msra.mxu0 0
        %1371 = vmatprep.subr.bf16.mxu0 0
        %1372 = vmatpush1.bf16.msra.mxu0 0
        %1373 = vmatprep.subr.bf16.mxu0 0
        %1374 = vmatpush1.bf16.msra.mxu0 0
        %1375 = vmatprep.subr.bf16.mxu0 0
        %1376 = vmatpush1.bf16.msra.mxu0 0
        %1377 = vmatprep.subr.bf16.mxu0 0
        %1378 = vmatpush1.bf16.msra.mxu0 0
        %1379 = vmatprep.subr.bf16.mxu0 0
        %1380 = vmatpush1.bf16.msra.mxu0 0
        %1381 = vmatprep.subr.bf16.mxu0 0
        %1382 = vmatpush1.bf16.msra.mxu0 0
        %1383 = vmatprep.subr.bf16.mxu0 0
        %1384 = vmatpush1.bf16.msra.mxu0 0
        %1385 = vmatprep.subr.bf16.mxu0 0
        %1386 = vmatpush1.bf16.msra.mxu0 0
        %1387 = vmatprep.subr.bf16.mxu0 0
        %1388 = vmatpush1.bf16.msra.mxu0 0
        %1389 = vmatprep.subr.bf16.mxu0 0
        %1390 = vmatpush1.bf16.msra.mxu0 0
        %1391 = vmatprep.subr.bf16.mxu0 0
        %1392 = vmatpush1.bf16.msra.mxu0 0
        %1393 = vmatprep.mubr.bf16.mxu0 0
        %1394 = vmatmul.mubr.bf16.gmra.mrb[0].mxu0 %v1355
        %v1395 = vpop.f32.mrb[0].mxu0
        %v1396 = vadd.f32 0.0, %v1395
        %v1397 = vpop.f32.mrb[0].mxu0
        %v1398 = vpop.f32.mrb[0].mxu0
        %v1399 = vpop.f32.mrb[0].mxu0
        %1400 = vdwg.mxu0
        %v1402 = vsel %vm937, %v1347, 0
        %v1405 = vsel %vm1357, %v1351, 0
        %1407 = vmatprep.subr.bf16.mxu0 0
        %1408 = vmatpush1.bf16.msra.mxu0 %v1405
        %1409 = vmatprep.subr.bf16.mxu0 0
        %1410 = vmatpush1.bf16.msra.mxu0 0
        %1411 = vmatprep.subr.bf16.mxu0 0
        %1412 = vmatpush1.bf16.msra.mxu0 0
        %1413 = vmatprep.subr.bf16.mxu0 0
        %1414 = vmatpush1.bf16.msra.mxu0 0
        %1415 = vmatprep.subr.bf16.mxu0 0
        %1416 = vmatpush1.bf16.msra.mxu0 0
        %1417 = vmatprep.subr.bf16.mxu0 0
        %1418 = vmatpush1.bf16.msra.mxu0 0
        %1419 = vmatprep.subr.bf16.mxu0 0
        %1420 = vmatpush1.bf16.msra.mxu0 0
        %1421 = vmatprep.subr.bf16.mxu0 0
        %1422 = vmatpush1.bf16.msra.mxu0 0
        %1423 = vmatprep.subr.bf16.mxu0 0
        %1424 = vmatpush1.bf16.msra.mxu0 0
        %1425 = vmatprep.subr.bf16.mxu0 0
        %1426 = vmatpush1.bf16.msra.mxu0 0
        %1427 = vmatprep.subr.bf16.mxu0 0
        %1428 = vmatpush1.bf16.msra.mxu0 0
        %1429 = vmatprep.subr.bf16.mxu0 0
        %1430 = vmatpush1.bf16.msra.mxu0 0
        %1431 = vmatprep.subr.bf16.mxu0 0
        %1432 = vmatpush1.bf16.msra.mxu0 0
        %1433 = vmatprep.subr.bf16.mxu0 0
        %1434 = vmatpush1.bf16.msra.mxu0 0
        %1435 = vmatprep.subr.bf16.mxu0 0
        %1436 = vmatpush1.bf16.msra.mxu0 0
        %1437 = vmatprep.subr.bf16.mxu0 0
        %1438 = vmatpush1.bf16.msra.mxu0 0
        %1439 = vmatprep.mubr.bf16.mxu0 0
        %1440 = vmatmul.mubr.bf16.gmra.mrb[0].mxu0 %v1402
        %v1441 = vpop.f32.mrb[0].mxu0
        %v1442 = vadd.f32 %v1396, %v1441
        %v1443 = vpop.f32.mrb[0].mxu0
        %v1444 = vpop.f32.mrb[0].mxu0
        %v1445 = vpop.f32.mrb[0].mxu0
        %1446 = vdwg.mxu0
        %s1447 = scalar_lea.vmem [#allocation14], 8
        %v1448 = vld [vmem:[%s1447] sm:$0xf]
        %v1450 = vsel %vm937, %v1349, 0
        %v1453 = vsel %vm1357, %v1448, 0
        %1455 = vmatprep.subr.bf16.mxu0 0
        %1456 = vmatpush1.bf16.msra.mxu0 %v1453
        %1457 = vmatprep.subr.bf16.mxu0 0
        %1458 = vmatpush1.bf16.msra.mxu0 0
        %1459 = vmatprep.subr.bf16.mxu0 0
        %1460 = vmatpush1.bf16.msra.mxu0 0
        %1461 = vmatprep.subr.bf16.mxu0 0
        %1462 = vmatpush1.bf16.msra.mxu0 0
        %1463 = vmatprep.subr.bf16.mxu0 0
        %1464 = vmatpush1.bf16.msra.mxu0 0
        %1465 = vmatprep.subr.bf16.mxu0 0
        %1466 = vmatpush1.bf16.msra.mxu0 0
        %1467 = vmatprep.subr.bf16.mxu0 0
        %1468 = vmatpush1.bf16.msra.mxu0 0
        %1469 = vmatprep.subr.bf16.mxu0 0
        %1470 = vmatpush1.bf16.msra.mxu0 0
        %1471 = vmatprep.subr.bf16.mxu0 0
        %1472 = vmatpush1.bf16.msra.mxu0 0
        %1473 = vmatprep.subr.bf16.mxu0 0
        %1474 = vmatpush1.bf16.msra.mxu0 0
        %1475 = vmatprep.subr.bf16.mxu0 0
        %1476 = vmatpush1.bf16.msra.mxu0 0
        %1477 = vmatprep.subr.bf16.mxu0 0
        %1478 = vmatpush1.bf16.msra.mxu0 0
        %1479 = vmatprep.subr.bf16.mxu0 0
        %1480 = vmatpush1.bf16.msra.mxu0 0
        %1481 = vmatprep.subr.bf16.mxu0 0
        %1482 = vmatpush1.bf16.msra.mxu0 0
        %1483 = vmatprep.subr.bf16.mxu0 0
        %1484 = vmatpush1.bf16.msra.mxu0 0
        %1485 = vmatprep.subr.bf16.mxu0 0
        %1486 = vmatpush1.bf16.msra.mxu0 0
        %1487 = vmatprep.mubr.bf16.mxu0 0
        %1488 = vmatmul.mubr.bf16.gmra.mrb[0].mxu0 %v1450
        %v1489 = vpop.f32.mrb[0].mxu0
        %v1490 = vadd.f32 0.0, %v1489
        %v1491 = vpop.f32.mrb[0].mxu0
        %v1492 = vpop.f32.mrb[0].mxu0
        %v1493 = vpop.f32.mrb[0].mxu0
        %1494 = vdwg.mxu0
        %v1495 = vadd.f32 %v1442, %v1490
        %s1496 = scalar_lea.vmem [#allocation14], 12
        %v1497 = vld [vmem:[%s1496] sm:$0xf]
        %v1499 = vsel %vm937, %v1350, 0
        %v1502 = vsel %vm1357, %v1497, 0
        %1504 = vmatprep.subr.bf16.mxu0 0
        %1505 = vmatpush1.bf16.msra.mxu0 %v1502
        %1506 = vmatprep.subr.bf16.mxu0 0
        %1507 = vmatpush1.bf16.msra.mxu0 0
        %1508 = vmatprep.subr.bf16.mxu0 0
        %1509 = vmatpush1.bf16.msra.mxu0 0
        %1510 = vmatprep.subr.bf16.mxu0 0
        %1511 = vmatpush1.bf16.msra.mxu0 0
        %1512 = vmatprep.subr.bf16.mxu0 0
        %1513 = vmatpush1.bf16.msra.mxu0 0
        %1514 = vmatprep.subr.bf16.mxu0 0
        %1515 = vmatpush1.bf16.msra.mxu0 0
        %1516 = vmatprep.subr.bf16.mxu0 0
        %1517 = vmatpush1.bf16.msra.mxu0 0
        %1518 = vmatprep.subr.bf16.mxu0 0
        %1519 = vmatpush1.bf16.msra.mxu0 0
        %1520 = vmatprep.subr.bf16.mxu0 0
        %1521 = vmatpush1.bf16.msra.mxu0 0
        %1522 = vmatprep.subr.bf16.mxu0 0
        %1523 = vmatpush1.bf16.msra.mxu0 0
        %1524 = vmatprep.subr.bf16.mxu0 0
        %1525 = vmatpush1.bf16.msra.mxu0 0
        %1526 = vmatprep.subr.bf16.mxu0 0
        %1527 = vmatpush1.bf16.msra.mxu0 0
        %1528 = vmatprep.subr.bf16.mxu0 0
        %1529 = vmatpush1.bf16.msra.mxu0 0
        %1530 = vmatprep.subr.bf16.mxu0 0
        %1531 = vmatpush1.bf16.msra.mxu0 0
        %1532 = vmatprep.subr.bf16.mxu0 0
        %1533 = vmatpush1.bf16.msra.mxu0 0
        %1534 = vmatprep.subr.bf16.mxu0 0
        %1535 = vmatpush1.bf16.msra.mxu0 0
        %1536 = vmatprep.mubr.bf16.mxu0 0
        %1537 = vmatmul.mubr.bf16.gmra.mrb[0].mxu0 %v1499
        %v1538 = vpop.f32.mrb[0].mxu0
        %v1539 = vadd.f32 0.0, %v1538
        %v1540 = vpop.f32.mrb[0].mxu0
        %v1541 = vpop.f32.mrb[0].mxu0
        %v1542 = vpop.f32.mrb[0].mxu0
        %1543 = vdwg.mxu0
        %v1544 = vadd.f32 %v1495, %v1539
        %v1545 = vadd.f32 %v801, %v1544
        %v1546 = vld [vmem:[#allocation16] sm:$0x1]
        %v1548 = vlaneseq
        %v1549 = vshrl.u32 %v1548, 7
        %v1550 = vsub.s32 0, %v1549
        %v1551 = vrot.slane %v1546, %v1550
        %v1553 = vadd.f32 %v1545, %v1551
        %v1554 = vld [vmem:[%s10] sm:$0x1]
        %v1555 = vld [vmem:[%s11] sm:$0x1]
        %v1556 = vsel %vm804, %v1553, 0.0
        %1557 = vadd.xlane.f32.xlu0 %v1556
        %v1558 = vpop.xlane.xlu0 %1557
        %v1559 = vmul.f32 %v1558, %v808
        %v1560 = vsub.f32 %v1553, %v1559
        %v1561 = vmul.f32 %v1560, %v1560
        %v1562 = vsel %vm804, %v1561, 0.0
        %1563 = vadd.xlane.f32.xlu0 %v1562
        %v1564 = vpop.xlane.xlu0 %1563
        %v1565 = vmul.f32 %v1564, %v808
        %v1566 = vadd.f32 %v1565, 1e-05
        %v1567 = vrsqrt.pop %v1566
        %v1568 = vmul.f32 %v1560, %v1567
        %v1570 = vlaneseq
        %v1571 = vshrl.u32 %v1570, 7
        %v1572 = vsub.s32 0, %v1571
        %v1573 = vrot.slane %v1554, %v1572
        %v1575 = vmul.f32 %v1568, %v1573
        %v1577 = vlaneseq
        %v1578 = vshrl.u32 %v1577, 7
        %v1579 = vsub.s32 0, %v1578
        %v1580 = vrot.slane %v1555, %v1579
        %v1582 = vadd.f32 %v1575, %v1580
        %v1583 = vpack.c.bf16 %v1582, %v1582
        %v1584 = vld [vmem:[%s12] sm:$0xf]
        %v1585 = vld [vmem:[%s12 + $0x4] sm:$0xf]
        %v1586 = vld [vmem:[%s12 + $0x8] sm:$0xf]
        %v1587 = vld [vmem:[%s12 + $0xc] sm:$0xf]
        %v1588 = vld [vmem:[%s13] sm:$0x1]
        %v1590 = vlaneseq
        %v1591 = vshrl.u32 %v1590, 7
        %v1592 = vsub.s32 0, %v1591
        %v1593 = vrot.slane %v1588, %v1592
        %v1599 = vunpack.c.l.b16 %v1584
        %v1600 = vunpack.c.l.b16 %v1585
        %v1601 = vunpack.c.l.b16 %v1586
        %v1602 = vunpack.c.l.b16 %v1587
        %v1603 = vpack.c.b16 %v1600, %v1599
        %v1604 = vpack.c.b16 %v1602, %v1601
        %v1608 = vsel %vm804, %v1583, 0
        %1610 = vmatprep.subr.bf16.mxu0 0
        %1611 = vmatpush1.bf16.msra.mxu0 %v1603
        %1612 = vmatprep.subr.bf16.mxu0 0
        %1613 = vmatpush1.bf16.msra.mxu0 %v1604
        %1614 = vmatprep.subr.bf16.mxu0 0
        %1615 = vmatpush1.bf16.msra.mxu0 0
        %1616 = vmatprep.subr.bf16.mxu0 0
        %1617 = vmatpush1.bf16.msra.mxu0 0
        %1618 = vmatprep.subr.bf16.mxu0 0
        %1619 = vmatpush1.bf16.msra.mxu0 0
        %1620 = vmatprep.subr.bf16.mxu0 0
        %1621 = vmatpush1.bf16.msra.mxu0 0
        %1622 = vmatprep.subr.bf16.mxu0 0
        %1623 = vmatpush1.bf16.msra.mxu0 0
        %1624 = vmatprep.subr.bf16.mxu0 0
        %1625 = vmatpush1.bf16.msra.mxu0 0
        %1626 = vmatprep.subr.bf16.mxu0 0
        %1627 = vmatpush1.bf16.msra.mxu0 0
        %1628 = vmatprep.subr.bf16.mxu0 0
        %1629 = vmatpush1.bf16.msra.mxu0 0
        %1630 = vmatprep.subr.bf16.mxu0 0
        %1631 = vmatpush1.bf16.msra.mxu0 0
        %1632 = vmatprep.subr.bf16.mxu0 0
        %1633 = vmatpush1.bf16.msra.mxu0 0
        %1634 = vmatprep.subr.bf16.mxu0 0
        %1635 = vmatpush1.bf16.msra.mxu0 0
        %1636 = vmatprep.subr.bf16.mxu0 0
        %1637 = vmatpush1.bf16.msra.mxu0 0
        %1638 = vmatprep.subr.bf16.mxu0 0
        %1639 = vmatpush1.bf16.msra.mxu0 0
        %1640 = vmatprep.subr.bf16.mxu0 0
        %1641 = vmatpush1.bf16.msra.mxu0 0
        %1642 = vmatprep.mubr.bf16.mxu0 0
        %1643 = vmatmul.mubr.bf16.gmra.mrb[0].mxu0 %v1608
        %v1644 = vpop.f32.mrb[0].mxu0
        %v1645 = vadd.f32 %v1593, %v1644
        %v1646 = vpop.f32.mrb[0].mxu0
        %v1647 = vpop.f32.mrb[0].mxu0
        %v1648 = vpop.f32.mrb[0].mxu0
        %1649 = vdwg.mxu0
        %v1650 = vmul.f32 %v1645, 0.5
        %v1651 = vmul.f32 %v1645, 0.70710677
        %v1652 = verf.f32.pop %v1651
        %v1653 = vadd.f32 %v1652, 1.0
        %v1654 = vmul.f32 %v1650, %v1653
        %v1655 = vpack.c.bf16 %v1654, %v1654
        %v1656 = vld [vmem:[%s14] sm:$0xf]
        %v1657 = vld [vmem:[%s14 + $0x4] sm:$0xf]
        %v1658 = vld [vmem:[%s14 + $0x8] sm:$0xf]
        %v1659 = vld [vmem:[%s14 + $0xc] sm:$0xf]
        %v1660 = vld [vmem:[%s14 + $0x10] sm:$0xf]
        %v1661 = vld [vmem:[%s14 + $0x14] sm:$0xf]
        %v1662 = vld [vmem:[%s14 + $0x18] sm:$0xf]
        %v1663 = vld [vmem:[%s14 + $0x1c] sm:$0xf]
        %v1664 = vld [vmem:[%s15] sm:$0x1]
        %v1666 = vlaneseq
        %v1667 = vshrl.u32 %v1666, 7
        %v1668 = vsub.s32 0, %v1667
        %v1669 = vrot.slane %v1664, %v1668
        %v1679 = vunpack.c.l.b16 %v1656
        %v1680 = vunpack.c.l.b16 %v1657
        %v1681 = vunpack.c.l.b16 %v1658
        %v1682 = vunpack.c.l.b16 %v1659
        %v1683 = vunpack.c.l.b16 %v1660
        %v1684 = vunpack.c.l.b16 %v1661
        %v1685 = vunpack.c.l.b16 %v1662
        %v1686 = vunpack.c.l.b16 %v1663
        %v1687 = vpack.c.b16 %v1680, %v1679
        %v1688 = vpack.c.b16 %v1682, %v1681
        %v1689 = vpack.c.b16 %v1684, %v1683
        %v1690 = vpack.c.b16 %v1686, %v1685
        %vm1695 = vcmask 523264
        %v1697 = vsel %vm1695, %v1655, 0
        %1699 = vmatprep.subr.bf16.mxu0 0
        %1700 = vmatpush1.bf16.msra.mxu0 %v1687
        %1701 = vmatprep.subr.bf16.mxu0 0
        %1702 = vmatpush1.bf16.msra.mxu0 %v1688
        %1703 = vmatprep.subr.bf16.mxu0 0
        %1704 = vmatpush1.bf16.msra.mxu0 %v1689
        %1705 = vmatprep.subr.bf16.mxu0 0
        %1706 = vmatpush1.bf16.msra.mxu0 %v1690
        %1707 = vmatprep.subr.bf16.mxu0 0
        %1708 = vmatpush1.bf16.msra.mxu0 0
        %1709 = vmatprep.subr.bf16.mxu0 0
        %1710 = vmatpush1.bf16.msra.mxu0 0
        %1711 = vmatprep.subr.bf16.mxu0 0
        %1712 = vmatpush1.bf16.msra.mxu0 0
        %1713 = vmatprep.subr.bf16.mxu0 0
        %1714 = vmatpush1.bf16.msra.mxu0 0
        %1715 = vmatprep.subr.bf16.mxu0 0
        %1716 = vmatpush1.bf16.msra.mxu0 0
        %1717 = vmatprep.subr.bf16.mxu0 0
        %1718 = vmatpush1.bf16.msra.mxu0 0
        %1719 = vmatprep.subr.bf16.mxu0 0
        %1720 = vmatpush1.bf16.msra.mxu0 0
        %1721 = vmatprep.subr.bf16.mxu0 0
        %1722 = vmatpush1.bf16.msra.mxu0 0
        %1723 = vmatprep.subr.bf16.mxu0 0
        %1724 = vmatpush1.bf16.msra.mxu0 0
        %1725 = vmatprep.subr.bf16.mxu0 0
        %1726 = vmatpush1.bf16.msra.mxu0 0
        %1727 = vmatprep.subr.bf16.mxu0 0
        %1728 = vmatpush1.bf16.msra.mxu0 0
        %1729 = vmatprep.subr.bf16.mxu0 0
        %1730 = vmatpush1.bf16.msra.mxu0 0
        %1731 = vmatprep.mubr.bf16.mxu0 0
        %1732 = vmatmul.mubr.bf16.gmra.mrb[0].mxu0 %v1697
        %v1733 = vpop.f32.mrb[0].mxu0
        %v1734 = vadd.f32 %v1669, %v1733
        %v1735 = vpop.f32.mrb[0].mxu0
        %v1736 = vpop.f32.mrb[0].mxu0
        %v1737 = vpop.f32.mrb[0].mxu0
        %1738 = vdwg.mxu0
        %v1739 = vadd.f32 %v1553, %v1734
        %1740 = vst.msk [vmem:[%s631] sm:$0xff] %vm804, %v1739
        %s1741 = sand.u32 %s402, 1
        %s1742 = scalar_lea.sflag [#allocation7], %s1741
        %s1743 = sand.u32 %s402, 1
        %s1744 = smul.addr %s1743, 8
        %s1745 = scalar_lea.vmem [#allocation17], %s1744
        // Predicated region
        $region117: #{tpu_custom_call.1} parent=83 // pred_check
          %p1746 = pneg %p412
        $region118: #{tpu_custom_call.1} parent=83 // pred_check_branch
          %1748 = sbr.rel (%p1746) target = $region120
        $region119: #{tpu_custom_call.1} parent=83 // pred_region
          %s1750 = ssub.s32 128, 128
          %1751 = vsyncadd %s1742, %s1750
          %s1752 = smul.addr %s38, 2
          %s1753 = sadd.s32 %s39, %s1752
          %s1754 = smul.addr %s1753, 128
          %s1755 = scalar_lea.hbm %s16, %s1754
          %s1757 = sshll.u32 %s1745, 4
          %s1758 = int_to_ptr.vmem [resolvable:$true] %s1757
          %1760 = dma.vmem_to_hbm [thread:$0]  %s1758, 128, %s1755, %s1742
        $region120: #{tpu_custom_call.1} parent=83 // pred_fallthru
          _
      $region84: #{tpu_custom_call.1} parent=5 // pred_fallthru
        _
      %p1761 = scmp.le.s32.totalorder 2, %s29
      // Predicated region
      $region121: #{tpu_custom_call.1} parent=5 // pred_check
        %p1762 = pneg %p1761
      $region122: #{tpu_custom_call.1} parent=5 // pred_check_branch
        %1764 = sbr.rel (%p1762) target = $region124
      $region123: #{tpu_custom_call.1} parent=5 // pred_region
        %s1765 = ssub.s32 %s29, 2
        // Predicated region
        $region125: #{tpu_custom_call.1} parent=123 // pred_check
          %p1766 = pneg %p418
        $region126: #{tpu_custom_call.1} parent=123 // pred_check_branch
          %1768 = sbr.rel (%p1766) target = $region128
        $region127: #{tpu_custom_call.1} parent=123 // pred_region
          %s1769 = sand.u32 %s403, 1
          %s1770 = scalar_lea.sflag [#allocation7], %s1769
          %s1771 = sand.u32 %s403, 1
          %s1772 = smul.addr %s1771, 8
          %s1773 = scalar_lea.vmem [#allocation17], %s1772
          %1774 = dma.done %s1770, 128
        $region128: #{tpu_custom_call.1} parent=123 // pred_fallthru
          _
      $region124: #{tpu_custom_call.1} parent=5 // pred_fallthru
        _
    $region6: #{tpu_custom_call.1} parent=1 // loop_footer
      %s33 = sadd.s32 1, %s29
    $region7: #{tpu_custom_call.1} parent=1 // loop_footer_branch
      %28 = sbr.rel target = $region3
    $region8: #{tpu_custom_call.1} parent=1 // loop_exit
      _
    %1775 = vsyncpa [#allocation6], 1
    %s1776 = scalar_lea.sflag [#allocation6], 1
    %1777 = vsyncpa %s1776, 1
    %1778 = vsyncpa [#allocation9], 1
    %1779 = vsyncpa [#allocation12], 1
    %1780 = vsyncpa [#allocation15], 1
    %1781 = vsyncpa [#allocation7], 1
    %s1782 = scalar_lea.sflag [#allocation7], 1
    %1783 = vsyncpa %s1782, 1

</llo_original>
